<compile_context>
chip_gen: v6e
topology: v6e:2x2x1
jax: 0.10.0
libtpu: 0.0.40
codegen_flags: <defaults>
</compile_context>

<pallas_src>
import jax
import jax.numpy as jnp
from jax.experimental import pallas as pl
from jax.experimental.pallas import tpu as pltpu

F_IN = 28 * 28          # 784 logical feature dim (kept unpadded end-to-end)


def _round_up(x, m):
    return (x + m - 1) // m * m


def autoencoder_kernel(
    x_ref,
    w1_ref, b1_ref,
    w2_ref, b2_ref,
    w3_ref, b3_ref,
    w4_ref, b4_ref,
    w5_ref, b5_ref,
    w6_ref, b6_ref,
    out_ref,
):
    # x tile: (TB, 784) f32 -> bf16 for the MXU; accumulate in f32.
    x = x_ref[...].astype(jnp.bfloat16)

    # ---- encoder ----
    h = jnp.dot(x, w1_ref[...], preferred_element_type=jnp.float32) + b1_ref[...]
    h = jnp.maximum(h, 0.0)                                          # (TB, 128)
    h = jnp.dot(h.astype(jnp.bfloat16), w2_ref[...],
                preferred_element_type=jnp.float32) + b2_ref[...]
    h = jnp.maximum(h, 0.0)                                          # (TB, 64)
    z = jnp.dot(h.astype(jnp.bfloat16), w3_ref[...],
                preferred_element_type=jnp.float32) + b3_ref[...]    # (TB, 32) latent

    # ---- decoder ----
    d = jnp.dot(z.astype(jnp.bfloat16), w4_ref[...],
                preferred_element_type=jnp.float32) + b4_ref[...]
    d = jnp.maximum(d, 0.0)                                          # (TB, 64)
    d = jnp.dot(d.astype(jnp.bfloat16), w5_ref[...],
                preferred_element_type=jnp.float32) + b5_ref[...]
    d = jnp.maximum(d, 0.0)                                          # (TB, 128)
    y = jnp.dot(d.astype(jnp.bfloat16), w6_ref[...],
                preferred_element_type=jnp.float32) + b6_ref[...]    # (TB, 784)

    # Sigmoid via a single EUP transcendental: sigmoid(y) = 0.5 * (tanh(y/2) + 1).
    # Kept in f32 so it is also optimal/safe on v5e (no bf16 VPU/EUP there).
    y = 0.5 * (jnp.tanh(0.5 * y) + 1.0)

    out_ref[...] = y.astype(out_ref.dtype)


def _choose_batch_tile(batch):
    """Return (TB, B_pad).

    Largest tile up to 1024 rows such that the grid has >=2 steps (v7x megacore
    sharding via "parallel" semantics) and batch-padding waste stays <=~12.5%.
    Tiny batches (<=16 rows) use a single step (tiles must be multiples of 8 rows).
    """
    bp8 = _round_up(max(batch, 1), 8)
    if bp8 <= 16:
        return bp8, bp8
    for tb in (1024, 512, 384, 256, 192, 128, 96, 64, 48, 32, 24, 16, 8):
        if tb >= bp8:
            continue                      # need at least 2 grid steps
        steps = -(-bp8 // tb)
        b_pad = steps * tb
        if b_pad - bp8 <= bp8 // 8:       # <=12.5% wasted rows
            return tb, b_pad
    return bp8, bp8


def prepare_params(params):
    """One-time per-model conversion (hoisted out of the per-call forward):
    bf16 weights (MXU-native inputs) and f32 (1, out) biases, flattened in
    kernel-argument order."""
    flat = []
    for (w, b) in params:
        flat.append(jnp.asarray(w, jnp.bfloat16))
        flat.append(jnp.asarray(b, jnp.float32).reshape(1, -1))
    return flat


def autoencoder_forward(x_nchw, prepared):
    """x_nchw: (B, 1, 28, 28) float32 -> (B, 784) float32 reconstruction.
    `prepared` is the output of prepare_params(params)."""
    B = x_nchw.shape[0]
    x_flat = x_nchw.reshape(B, F_IN)                                 # nn.Flatten (view)
    if x_flat.dtype != jnp.float32:
        x_flat = x_flat.astype(jnp.float32)

    TB, B_pad = _choose_batch_tile(B)
    if B_pad != B:                                                   # batch rows only
        x_flat = jnp.pad(x_flat, ((0, B_pad - B), (0, 0)))

    # x/out tiled over the batch; weights/biases VMEM-resident (constant block index).
    x_spec = pl.BlockSpec((TB, F_IN), lambda i: (i, 0))
    param_specs = [pl.BlockSpec(p.shape, lambda i: (0, 0)) for p in prepared]
    out_spec = pl.BlockSpec((TB, F_IN), lambda i: (i, 0))

    # Advisory cost estimate for the XLA scheduler.
    layer_dims = [(F_IN, 128), (128, 64), (64, 32), (32, 64), (64, 128), (128, F_IN)]
    flops = 2 * B_pad * sum(m * n for m, n in layer_dims)
    bytes_accessed = (
        2 * B_pad * F_IN * 4                                          # x load + out store
        + sum(int(p.size) * p.dtype.itemsize for p in prepared)
    )
    cost = pl.CostEstimate(
        flops=flops,
        transcendentals=B_pad * F_IN,                                 # tanh in the sigmoid
        bytes_accessed=bytes_accessed,
    )

    out_p = pl.pallas_call(
        autoencoder_kernel,
        out_shape=jax.ShapeDtypeStruct((B_pad, F_IN), jnp.float32),
        grid_spec=pltpu.PrefetchScalarGridSpec(
            num_scalar_prefetch=0,
            grid=(B_pad // TB,),
            in_specs=[x_spec] + param_specs,
            out_specs=out_spec,
        ),
        compiler_params=pltpu.CompilerParams(
            dimension_semantics=("parallel",),
            vmem_limit_bytes=32 * 1024 * 1024,   # TB=1024 f32 tiles fit everywhere
        ),
        cost_estimate=cost,
    )(x_flat, *prepared)

    return out_p if B_pad == B else out_p[:B]


def init_params(key):
    """Deterministic params mimicking nn.Linear default init (U[-1/sqrt(in), 1/sqrt(in)]).
    Weights stored as (in, out) so the kernel computes x @ W + b (== PyTorch x @ W.T + b).
    NOTE: real PyTorch nn.Linear weights ((out, in)) must be transposed before use."""
    dims = [(F_IN, 128), (128, 64), (64, 32),       # encoder
            (32, 64), (64, 128), (128, F_IN)]       # decoder
    params = []
    for (fan_in, fan_out) in dims:
        key, kw, kb = jax.random.split(key, 3)
        bound = 1.0 / jnp.sqrt(float(fan_in))
        w = jax.random.uniform(kw, (fan_in, fan_out), jnp.float32, -bound, bound)
        b = jax.random.uniform(kb, (1, fan_out), jnp.float32, -bound, bound)
        params.append((w, b))
    return params


def reference_forward(x_nchw, params):
    """Plain-JAX f32 reference matching PyTorch semantics."""
    B = x_nchw.shape[0]
    h = x_nchw.reshape(B, F_IN).astype(jnp.float32)
    (w1, b1), (w2, b2), (w3, b3), (w4, b4), (w5, b5), (w6, b6) = params
    h = jnp.maximum(h @ w1 + b1, 0.0)
    h = jnp.maximum(h @ w2 + b2, 0.0)
    z = h @ w3 + b3
    d = jnp.maximum(z @ w4 + b4, 0.0)
    d = jnp.maximum(d @ w5 + b5, 0.0)
    return jax.nn.sigmoid(d @ w6 + b6)


if __name__ == "__main__":
    key = jax.random.PRNGKey(0)
    key, kx1, kx2 = jax.random.split(key, 3)

    params = init_params(key)
    prepared = prepare_params(params)      # one-time weight prep (bf16 casts)

    # Small MNIST-like batch: single grid step path.
    B1 = 8
    x1 = jax.random.uniform(kx1, (B1, 1, 28, 28), jnp.float32)
    out1 = jax.block_until_ready(autoencoder_forward(x1, prepared))
    ref1 = reference_forward(x1, params)
    assert out1.shape == (B1, F_IN)
    assert jnp.allclose(out1, ref1, atol=2e-2, rtol=2e-2), "mismatch vs reference (B=8)"

    # Non-multiple batch: exercises multi-step grid + batch-row padding/slice.
    B2 = 18
    x2 = jax.random.uniform(kx2, (B2, 1, 28, 28), jnp.float32)
    out2 = jax.block_until_ready(autoencoder_forward(x2, prepared))
    ref2 = reference_forward(x2, params)
    assert out2.shape == (B2, F_IN)
    assert jnp.allclose(out2, ref2, atol=2e-2, rtol=2e-2), "mismatch vs reference (B=18)"

    print("KERNEL_OK")
</pallas_src>

<mosaic_0001>
module attributes {stable_mosaic.version = 11 : i64} {
  func.func @autoencoder_kernel(%arg0: i32, %arg1: memref<8x784xf32, #tpu.memory_space<vmem>>, %arg2: memref<784x128xbf16, #tpu.memory_space<vmem>>, %arg3: memref<1x128xf32, #tpu.memory_space<vmem>>, %arg4: memref<128x64xbf16, #tpu.memory_space<vmem>>, %arg5: memref<1x64xf32, #tpu.memory_space<vmem>>, %arg6: memref<64x32xbf16, #tpu.memory_space<vmem>>, %arg7: memref<1x32xf32, #tpu.memory_space<vmem>>, %arg8: memref<32x64xbf16, #tpu.memory_space<vmem>>, %arg9: memref<1x64xf32, #tpu.memory_space<vmem>>, %arg10: memref<64x128xbf16, #tpu.memory_space<vmem>>, %arg11: memref<1x128xf32, #tpu.memory_space<vmem>>, %arg12: memref<128x784xbf16, #tpu.memory_space<vmem>>, %arg13: memref<1x784xf32, #tpu.memory_space<vmem>>, %arg14: memref<8x784xf32, #tpu.memory_space<vmem>>) attributes {dimension_semantics = [#tpu.dimension_semantics<parallel>], iteration_bounds = array<i64: 1>, scalar_prefetch = 0 : i64, scratch_operands = 0 : i64, tpu.core_type = #tpu.core_type<tc>, window_params = [{transform_indices = @transform_0, window_bounds = array<i64: 8, 784>}, {pipeline_mode = #tpu.pipeline_mode<synchronous>, transform_indices = @transform_1, window_bounds = array<i64: 784, 128>}, {pipeline_mode = #tpu.pipeline_mode<synchronous>, transform_indices = @transform_2, window_bounds = array<i64: 1, 128>}, {pipeline_mode = #tpu.pipeline_mode<synchronous>, transform_indices = @transform_3, window_bounds = array<i64: 128, 64>}, {pipeline_mode = #tpu.pipeline_mode<synchronous>, transform_indices = @transform_4, window_bounds = array<i64: 1, 64>}, {pipeline_mode = #tpu.pipeline_mode<synchronous>, transform_indices = @transform_5, window_bounds = array<i64: 64, 32>}, {pipeline_mode = #tpu.pipeline_mode<synchronous>, transform_indices = @transform_6, window_bounds = array<i64: 1, 32>}, {pipeline_mode = #tpu.pipeline_mode<synchronous>, transform_indices = @transform_7, window_bounds = array<i64: 32, 64>}, {pipeline_mode = #tpu.pipeline_mode<synchronous>, transform_indices = @transform_8, window_bounds = array<i64: 1, 64>}, {pipeline_mode = #tpu.pipeline_mode<synchronous>, transform_indices = @transform_9, window_bounds = array<i64: 64, 128>}, {pipeline_mode = #tpu.pipeline_mode<synchronous>, transform_indices = @transform_10, window_bounds = array<i64: 1, 128>}, {pipeline_mode = #tpu.pipeline_mode<synchronous>, transform_indices = @transform_11, window_bounds = array<i64: 128, 784>}, {pipeline_mode = #tpu.pipeline_mode<synchronous>, transform_indices = @transform_12, window_bounds = array<i64: 1, 784>}, {transform_indices = @transform_13, window_bounds = array<i64: 8, 784>}]} {
    %c0 = arith.constant 0 : index
    %c0_0 = arith.constant 0 : index
    %0 = vector.load %arg1[%c0, %c0_0] : memref<8x784xf32, #tpu.memory_space<vmem>>, vector<8x784xf32>
    %1 = arith.truncf %0 : vector<8x784xf32> to vector<8x784xbf16>
    %c0_1 = arith.constant 0 : index
    %c0_2 = arith.constant 0 : index
    %2 = vector.load %arg2[%c0_1, %c0_2] : memref<784x128xbf16, #tpu.memory_space<vmem>>, vector<784x128xbf16>
    %cst = arith.constant dense<0.000000e+00> : vector<8x128xf32>
    %3 = tpu.matmul %1, %2, %cst {dimension_numbers = #tpu.dot_dimension_numbers<[1], [0], [0], [1], [0, 0, 1, 1], [], []>} : vector<8x784xbf16>, vector<784x128xbf16>, vector<8x128xf32> -> vector<8x128xf32>
    %c0_3 = arith.constant 0 : index
    %c0_4 = arith.constant 0 : index
    %4 = vector.load %arg3[%c0_3, %c0_4] : memref<1x128xf32, #tpu.memory_space<vmem>>, vector<1x128xf32>
    %5 = vector.broadcast %4 : vector<1x128xf32> to vector<8x128xf32>
    %6 = arith.addf %3, %5 : vector<8x128xf32>
    %cst_5 = arith.constant 0.000000e+00 : f32
    %7 = vector.broadcast %cst_5 : f32 to vector<8x128xf32>
    %8 = arith.maximumf %6, %7 : vector<8x128xf32>
    %9 = arith.truncf %8 : vector<8x128xf32> to vector<8x128xbf16>
    %c0_6 = arith.constant 0 : index
    %c0_7 = arith.constant 0 : index
    %10 = vector.load %arg4[%c0_6, %c0_7] : memref<128x64xbf16, #tpu.memory_space<vmem>>, vector<128x64xbf16>
    %cst_8 = arith.constant dense<0.000000e+00> : vector<8x64xf32>
    %11 = tpu.matmul %9, %10, %cst_8 {dimension_numbers = #tpu.dot_dimension_numbers<[1], [0], [0], [1], [0, 0, 1, 1], [], []>} : vector<8x128xbf16>, vector<128x64xbf16>, vector<8x64xf32> -> vector<8x64xf32>
    %c0_9 = arith.constant 0 : index
    %c0_10 = arith.constant 0 : index
    %12 = vector.load %arg5[%c0_9, %c0_10] : memref<1x64xf32, #tpu.memory_space<vmem>>, vector<1x64xf32>
    %13 = vector.broadcast %12 : vector<1x64xf32> to vector<8x64xf32>
    %14 = arith.addf %11, %13 : vector<8x64xf32>
    %cst_11 = arith.constant 0.000000e+00 : f32
    %15 = vector.broadcast %cst_11 : f32 to vector<8x64xf32>
    %16 = arith.maximumf %14, %15 : vector<8x64xf32>
    %17 = arith.truncf %16 : vector<8x64xf32> to vector<8x64xbf16>
    %c0_12 = arith.constant 0 : index
    %c0_13 = arith.constant 0 : index
    %18 = vector.load %arg6[%c0_12, %c0_13] : memref<64x32xbf16, #tpu.memory_space<vmem>>, vector<64x32xbf16>
    %cst_14 = arith.constant dense<0.000000e+00> : vector<8x32xf32>
    %19 = tpu.matmul %17, %18, %cst_14 {dimension_numbers = #tpu.dot_dimension_numbers<[1], [0], [0], [1], [0, 0, 1, 1], [], []>} : vector<8x64xbf16>, vector<64x32xbf16>, vector<8x32xf32> -> vector<8x32xf32>
    %c0_15 = arith.constant 0 : index
    %c0_16 = arith.constant 0 : index
    %20 = vector.load %arg7[%c0_15, %c0_16] : memref<1x32xf32, #tpu.memory_space<vmem>>, vector<1x32xf32>
    %21 = vector.broadcast %20 : vector<1x32xf32> to vector<8x32xf32>
    %22 = arith.addf %19, %21 : vector<8x32xf32>
    %23 = arith.truncf %22 : vector<8x32xf32> to vector<8x32xbf16>
    %c0_17 = arith.constant 0 : index
    %c0_18 = arith.constant 0 : index
    %24 = vector.load %arg8[%c0_17, %c0_18] : memref<32x64xbf16, #tpu.memory_space<vmem>>, vector<32x64xbf16>
    %cst_19 = arith.constant dense<0.000000e+00> : vector<8x64xf32>
    %25 = tpu.matmul %23, %24, %cst_19 {dimension_numbers = #tpu.dot_dimension_numbers<[1], [0], [0], [1], [0, 0, 1, 1], [], []>} : vector<8x32xbf16>, vector<32x64xbf16>, vector<8x64xf32> -> vector<8x64xf32>
    %c0_20 = arith.constant 0 : index
    %c0_21 = arith.constant 0 : index
    %26 = vector.load %arg9[%c0_20, %c0_21] : memref<1x64xf32, #tpu.memory_space<vmem>>, vector<1x64xf32>
    %27 = vector.broadcast %26 : vector<1x64xf32> to vector<8x64xf32>
    %28 = arith.addf %25, %27 : vector<8x64xf32>
    %cst_22 = arith.constant 0.000000e+00 : f32
    %29 = vector.broadcast %cst_22 : f32 to vector<8x64xf32>
    %30 = arith.maximumf %28, %29 : vector<8x64xf32>
    %31 = arith.truncf %30 : vector<8x64xf32> to vector<8x64xbf16>
    %c0_23 = arith.constant 0 : index
    %c0_24 = arith.constant 0 : index
    %32 = vector.load %arg10[%c0_23, %c0_24] : memref<64x128xbf16, #tpu.memory_space<vmem>>, vector<64x128xbf16>
    %cst_25 = arith.constant dense<0.000000e+00> : vector<8x128xf32>
    %33 = tpu.matmul %31, %32, %cst_25 {dimension_numbers = #tpu.dot_dimension_numbers<[1], [0], [0], [1], [0, 0, 1, 1], [], []>} : vector<8x64xbf16>, vector<64x128xbf16>, vector<8x128xf32> -> vector<8x128xf32>
    %c0_26 = arith.constant 0 : index
    %c0_27 = arith.constant 0 : index
    %34 = vector.load %arg11[%c0_26, %c0_27] : memref<1x128xf32, #tpu.memory_space<vmem>>, vector<1x128xf32>
    %35 = vector.broadcast %34 : vector<1x128xf32> to vector<8x128xf32>
    %36 = arith.addf %33, %35 : vector<8x128xf32>
    %cst_28 = arith.constant 0.000000e+00 : f32
    %37 = vector.broadcast %cst_28 : f32 to vector<8x128xf32>
    %38 = arith.maximumf %36, %37 : vector<8x128xf32>
    %39 = arith.truncf %38 : vector<8x128xf32> to vector<8x128xbf16>
    %c0_29 = arith.constant 0 : index
    %c0_30 = arith.constant 0 : index
    %40 = vector.load %arg12[%c0_29, %c0_30] : memref<128x784xbf16, #tpu.memory_space<vmem>>, vector<128x784xbf16>
    %cst_31 = arith.constant dense<0.000000e+00> : vector<8x784xf32>
    %41 = tpu.matmul %39, %40, %cst_31 {dimension_numbers = #tpu.dot_dimension_numbers<[1], [0], [0], [1], [0, 0, 1, 1], [], []>} : vector<8x128xbf16>, vector<128x784xbf16>, vector<8x784xf32> -> vector<8x784xf32>
    %c0_32 = arith.constant 0 : index
    %c0_33 = arith.constant 0 : index
    %42 = vector.load %arg13[%c0_32, %c0_33] : memref<1x784xf32, #tpu.memory_space<vmem>>, vector<1x784xf32>
    %43 = vector.broadcast %42 : vector<1x784xf32> to vector<8x784xf32>
    %44 = arith.addf %41, %43 : vector<8x784xf32>
    %cst_34 = arith.constant 5.000000e-01 : f32
    %45 = vector.broadcast %cst_34 : f32 to vector<8x784xf32>
    %46 = arith.mulf %45, %44 : vector<8x784xf32>
    %47 = math.tanh %46 : vector<8x784xf32>
    %cst_35 = arith.constant 1.000000e+00 : f32
    %48 = vector.broadcast %cst_35 : f32 to vector<8x784xf32>
    %49 = arith.addf %47, %48 : vector<8x784xf32>
    %cst_36 = arith.constant 5.000000e-01 : f32
    %50 = vector.broadcast %cst_36 : f32 to vector<8x784xf32>
    %51 = arith.mulf %50, %49 : vector<8x784xf32>
    %c0_37 = arith.constant 0 : index
    %c0_38 = arith.constant 0 : index
    %52 = vector.load %arg14[%c0_37, %c0_38] : memref<8x784xf32, #tpu.memory_space<vmem>>, vector<8x784xf32>
    tpu.vector_store %arg14[%c0_37, %c0_38], %51 {strides = array<i32>} : memref<8x784xf32, #tpu.memory_space<vmem>>, vector<8x784xf32>,
    return
  }
  func.func @transform_0(%arg0: i32) -> (i32, i32) {
    %c0_i32 = arith.constant 0 : i32
    %c0_i32_0 = arith.constant 0 : i32
    return %arg0, %c0_i32 : i32, i32
  }
  func.func @transform_1(%arg0: i32) -> (i32, i32) {
    %c0_i32 = arith.constant 0 : i32
    %c0_i32_0 = arith.constant 0 : i32
    %c0_i32_1 = arith.constant 0 : i32
    return %c0_i32, %c0_i32_0 : i32, i32
  }
  func.func @transform_2(%arg0: i32) -> (i32, i32) {
    %c0_i32 = arith.constant 0 : i32
    %c0_i32_0 = arith.constant 0 : i32
    %c0_i32_1 = arith.constant 0 : i32
    return %c0_i32, %c0_i32_0 : i32, i32
  }
  func.func @transform_3(%arg0: i32) -> (i32, i32) {
    %c0_i32 = arith.constant 0 : i32
    %c0_i32_0 = arith.constant 0 : i32
    %c0_i32_1 = arith.constant 0 : i32
    return %c0_i32, %c0_i32_0 : i32, i32
  }
  func.func @transform_4(%arg0: i32) -> (i32, i32) {
    %c0_i32 = arith.constant 0 : i32
    %c0_i32_0 = arith.constant 0 : i32
    %c0_i32_1 = arith.constant 0 : i32
    return %c0_i32, %c0_i32_0 : i32, i32
  }
  func.func @transform_5(%arg0: i32) -> (i32, i32) {
    %c0_i32 = arith.constant 0 : i32
    %c0_i32_0 = arith.constant 0 : i32
    %c0_i32_1 = arith.constant 0 : i32
    return %c0_i32, %c0_i32_0 : i32, i32
  }
  func.func @transform_6(%arg0: i32) -> (i32, i32) {
    %c0_i32 = arith.constant 0 : i32
    %c0_i32_0 = arith.constant 0 : i32
    %c0_i32_1 = arith.constant 0 : i32
    return %c0_i32, %c0_i32_0 : i32, i32
  }
  func.func @transform_7(%arg0: i32) -> (i32, i32) {
    %c0_i32 = arith.constant 0 : i32
    %c0_i32_0 = arith.constant 0 : i32
    %c0_i32_1 = arith.constant 0 : i32
    return %c0_i32, %c0_i32_0 : i32, i32
  }
  func.func @transform_8(%arg0: i32) -> (i32, i32) {
    %c0_i32 = arith.constant 0 : i32
    %c0_i32_0 = arith.constant 0 : i32
    %c0_i32_1 = arith.constant 0 : i32
    return %c0_i32, %c0_i32_0 : i32, i32
  }
  func.func @transform_9(%arg0: i32) -> (i32, i32) {
    %c0_i32 = arith.constant 0 : i32
    %c0_i32_0 = arith.constant 0 : i32
    %c0_i32_1 = arith.constant 0 : i32
    return %c0_i32, %c0_i32_0 : i32, i32
  }
  func.func @transform_10(%arg0: i32) -> (i32, i32) {
    %c0_i32 = arith.constant 0 : i32
    %c0_i32_0 = arith.constant 0 : i32
    %c0_i32_1 = arith.constant 0 : i32
    return %c0_i32, %c0_i32_0 : i32, i32
  }
  func.func @transform_11(%arg0: i32) -> (i32, i32) {
    %c0_i32 = arith.constant 0 : i32
    %c0_i32_0 = arith.constant 0 : i32
    %c0_i32_1 = arith.constant 0 : i32
    return %c0_i32, %c0_i32_0 : i32, i32
  }
  func.func @transform_12(%arg0: i32) -> (i32, i32) {
    %c0_i32 = arith.constant 0 : i32
    %c0_i32_0 = arith.constant 0 : i32
    %c0_i32_1 = arith.constant 0 : i32
    return %c0_i32, %c0_i32_0 : i32, i32
  }
  func.func @transform_13(%arg0: i32) -> (i32, i32) {
    %c0_i32 = arith.constant 0 : i32
    %c0_i32_0 = arith.constant 0 : i32
    return %arg0, %c0_i32 : i32, i32
  }
}

</mosaic_0001>

<llo_original>
// kernel: tpu_custom_call.1
$region0: #{tpu_custom_call.1}
  #allocation0 [shape = 'u32[]', space=smem, size = 0x4, offset = 0x4, fixed_abs, tag = 'smem constant byte address 0x4 - core index']
  #allocation1 [shape = 'u32[144,128]{1,0:T(1,128)}', space=vmem, size = 0x12000, scoped, tag = 'internal scratch']
  %s0 = inlined_call_operand.vmem [shape: f32[8,784], index: 0, kind: input, shape index: {}]
  %s1 = inlined_call_operand.vmem [shape: bf16[784,128], index: 1, kind: input, shape index: {}]
  %s2 = inlined_call_operand.vmem [shape: f32[1,128], index: 2, kind: input, shape index: {}]
  %s3 = inlined_call_operand.vmem [shape: bf16[128,64], index: 3, kind: input, shape index: {}]
  %s4 = inlined_call_operand.vmem [shape: f32[1,64], index: 4, kind: input, shape index: {}]
  %s5 = inlined_call_operand.vmem [shape: bf16[64,32], index: 5, kind: input, shape index: {}]
  %s6 = inlined_call_operand.vmem [shape: f32[1,32], index: 6, kind: input, shape index: {}]
  %s7 = inlined_call_operand.vmem [shape: bf16[32,64], index: 7, kind: input, shape index: {}]
  %s8 = inlined_call_operand.vmem [shape: f32[1,64], index: 8, kind: input, shape index: {}]
  %s9 = inlined_call_operand.vmem [shape: bf16[64,128], index: 9, kind: input, shape index: {}]
  %s10 = inlined_call_operand.vmem [shape: f32[1,128], index: 10, kind: input, shape index: {}]
  %s11 = inlined_call_operand.vmem [shape: bf16[128,784], index: 11, kind: input, shape index: {}]
  %s12 = inlined_call_operand.vmem [shape: f32[1,784], index: 12, kind: input, shape index: {}]
  %s13 = inlined_call_operand.hbm [shape: f32[8,784], index: 13, kind: output, shape index: {}]
  %s14 = sld [smem:[#allocation0]]
  $region62: #{tpu_custom_call.1} parent=0
    _
  %s16 = ssub.s32 1, %s14
  %s17 = scalar_select 0, %s16, %s14
  $region1: #{tpu_custom_call.1} parent=0
    #allocation2 [shape = 'u8[28672]{0}', space=vmem, size = 0x7000, scoped, tag = 'output window, operand 0, single buffered']
    #allocation3 [shape = 's32[1]{0}', space=sflag, size = 0x4, scoped, tag = 'scoped memory for tpu_custom_call.1']
    %18 = vsyncpa [#allocation3], 0
    // Predicated region
    $region2: #{tpu_custom_call.1} parent=1 // pred_check
      _
    $region3: #{tpu_custom_call.1} parent=1 // pred_check_branch
      %20 = sbr.rel (0) target = $region5
    $region4: #{tpu_custom_call.1} parent=1 // pred_region
      _
    $region5: #{tpu_custom_call.1} parent=1 // pred_fallthru
      _
    // Predicated region
    $region6: #{tpu_custom_call.1} parent=1 // pred_check
      _
    $region7: #{tpu_custom_call.1} parent=1 // pred_check_branch
      %22 = sbr.rel (0) target = $region9
    $region8: #{tpu_custom_call.1} parent=1 // pred_region
      _
    $region9: #{tpu_custom_call.1} parent=1 // pred_fallthru
      _
    // Predicated region
    $region10: #{tpu_custom_call.1} parent=1 // pred_check
      _
    $region11: #{tpu_custom_call.1} parent=1 // pred_check_branch
      %24 = sbr.rel (0) target = $region13
    $region12: #{tpu_custom_call.1} parent=1 // pred_region
      _
    $region13: #{tpu_custom_call.1} parent=1 // pred_fallthru
      _
    // Predicated region
    $region14: #{tpu_custom_call.1} parent=1 // pred_check
      _
    $region15: #{tpu_custom_call.1} parent=1 // pred_check_branch
      %26 = sbr.rel (0) target = $region17
    $region16: #{tpu_custom_call.1} parent=1 // pred_region
      _
    $region17: #{tpu_custom_call.1} parent=1 // pred_fallthru
      _
    // Predicated region
    $region18: #{tpu_custom_call.1} parent=1 // pred_check
      _
    $region19: #{tpu_custom_call.1} parent=1 // pred_check_branch
      %28 = sbr.rel (0) target = $region21
    $region20: #{tpu_custom_call.1} parent=1 // pred_region
      _
    $region21: #{tpu_custom_call.1} parent=1 // pred_fallthru
      _
    // Predicated region
    $region22: #{tpu_custom_call.1} parent=1 // pred_check
      _
    $region23: #{tpu_custom_call.1} parent=1 // pred_check_branch
      %30 = sbr.rel (0) target = $region25
    $region24: #{tpu_custom_call.1} parent=1 // pred_region
      _
    $region25: #{tpu_custom_call.1} parent=1 // pred_fallthru
      _
    // Predicated region
    $region26: #{tpu_custom_call.1} parent=1 // pred_check
      _
    $region27: #{tpu_custom_call.1} parent=1 // pred_check_branch
      %32 = sbr.rel (0) target = $region29
    $region28: #{tpu_custom_call.1} parent=1 // pred_region
      _
    $region29: #{tpu_custom_call.1} parent=1 // pred_fallthru
      _
    // Predicated region
    $region30: #{tpu_custom_call.1} parent=1 // pred_check
      _
    $region31: #{tpu_custom_call.1} parent=1 // pred_check_branch
      %34 = sbr.rel (0) target = $region33
    $region32: #{tpu_custom_call.1} parent=1 // pred_region
      _
    $region33: #{tpu_custom_call.1} parent=1 // pred_fallthru
      _
    // Predicated region
    $region34: #{tpu_custom_call.1} parent=1 // pred_check
      _
    $region35: #{tpu_custom_call.1} parent=1 // pred_check_branch
      %36 = sbr.rel (0) target = $region37
    $region36: #{tpu_custom_call.1} parent=1 // pred_region
      _
    $region37: #{tpu_custom_call.1} parent=1 // pred_fallthru
      _
    // Predicated region
    $region38: #{tpu_custom_call.1} parent=1 // pred_check
      _
    $region39: #{tpu_custom_call.1} parent=1 // pred_check_branch
      %38 = sbr.rel (0) target = $region41
    $region40: #{tpu_custom_call.1} parent=1 // pred_region
      _
    $region41: #{tpu_custom_call.1} parent=1 // pred_fallthru
      _
    // Predicated region
    $region42: #{tpu_custom_call.1} parent=1 // pred_check
      _
    $region43: #{tpu_custom_call.1} parent=1 // pred_check_branch
      %40 = sbr.rel (0) target = $region45
    $region44: #{tpu_custom_call.1} parent=1 // pred_region
      _
    $region45: #{tpu_custom_call.1} parent=1 // pred_fallthru
      _
    // Predicated region
    $region46: #{tpu_custom_call.1} parent=1 // pred_check
      _
    $region47: #{tpu_custom_call.1} parent=1 // pred_check_branch
      %42 = sbr.rel (0) target = $region49
    $region48: #{tpu_custom_call.1} parent=1 // pred_region
      _
    $region49: #{tpu_custom_call.1} parent=1 // pred_fallthru
      _
    // Predicated region
    $region50: #{tpu_custom_call.1} parent=1 // pred_check
      _
    $region51: #{tpu_custom_call.1} parent=1 // pred_check_branch
      %44 = sbr.rel (0) target = $region53
    $region52: #{tpu_custom_call.1} parent=1 // pred_region
      _
    $region53: #{tpu_custom_call.1} parent=1 // pred_fallthru
      _
    %v46 = vld [vmem:[%s0] sm:$0xff]
    %v47 = vld [vmem:[%s0 + $0x8] sm:$0xff]
    %v48 = vld [vmem:[%s0 + $0x10] sm:$0xff]
    %v49 = vld [vmem:[%s0 + $0x18] sm:$0xff]
    %v50 = vld [vmem:[%s0 + $0x20] sm:$0xff]
    %v51 = vld [vmem:[%s0 + $0x28] sm:$0xff]
    %v52 = vld [vmem:[%s0 + $0x30] sm:$0xff]
    %v53 = vpack.c.bf16 %v46, %v46
    %v54 = vpack.c.bf16 %v47, %v47
    %v55 = vpack.c.bf16 %v48, %v48
    %v56 = vpack.c.bf16 %v49, %v49
    %v57 = vpack.c.bf16 %v50, %v50
    %v58 = vpack.c.bf16 %v51, %v51
    %v59 = vpack.c.bf16 %v52, %v52
    %v60 = vld [vmem:[%s1] sm:$0xf]
    %v61 = vld [vmem:[%s1 + $0x4] sm:$0xf]
    %v62 = vld [vmem:[%s1 + $0x8] sm:$0xf]
    %v63 = vld [vmem:[%s1 + $0xc] sm:$0xf]
    %v64 = vld [vmem:[%s1 + $0x10] sm:$0xf]
    %v65 = vld [vmem:[%s1 + $0x14] sm:$0xf]
    %v66 = vld [vmem:[%s1 + $0x18] sm:$0xf]
    %v67 = vld [vmem:[%s1 + $0x1c] sm:$0xf]
    %v68 = vld [vmem:[%s1 + $0x20] sm:$0xf]
    %v69 = vld [vmem:[%s1 + $0x24] sm:$0xf]
    %v70 = vld [vmem:[%s1 + $0x28] sm:$0xf]
    %v71 = vld [vmem:[%s1 + $0x2c] sm:$0xf]
    %v72 = vld [vmem:[%s1 + $0x30] sm:$0xf]
    %v73 = vld [vmem:[%s1 + $0x34] sm:$0xf]
    %v74 = vld [vmem:[%s1 + $0x38] sm:$0xf]
    %v75 = vld [vmem:[%s1 + $0x3c] sm:$0xf]
    %v76 = vld [vmem:[%s1 + $0x40] sm:$0xf]
    %v77 = vld [vmem:[%s1 + $0x44] sm:$0xf]
    %v78 = vld [vmem:[%s1 + $0x48] sm:$0xf]
    %v79 = vld [vmem:[%s1 + $0x4c] sm:$0xf]
    %v80 = vld [vmem:[%s1 + $0x50] sm:$0xf]
    %v81 = vld [vmem:[%s1 + $0x54] sm:$0xf]
    %v82 = vld [vmem:[%s1 + $0x58] sm:$0xf]
    %v83 = vld [vmem:[%s1 + $0x5c] sm:$0xf]
    %v84 = vld [vmem:[%s1 + $0x60] sm:$0xf]
    %v85 = vld [vmem:[%s1 + $0x64] sm:$0xf]
    %v86 = vld [vmem:[%s1 + $0x68] sm:$0xf]
    %v87 = vld [vmem:[%s1 + $0x6c] sm:$0xf]
    %v88 = vld [vmem:[%s1 + $0x70] sm:$0xf]
    %v89 = vld [vmem:[%s1 + $0x74] sm:$0xf]
    %v90 = vld [vmem:[%s1 + $0x78] sm:$0xf]
    %v91 = vld [vmem:[%s1 + $0x7c] sm:$0xf]
    %v92 = vld [vmem:[%s1 + $0x80] sm:$0xf]
    %v93 = vld [vmem:[%s1 + $0x84] sm:$0xf]
    %v94 = vld [vmem:[%s1 + $0x88] sm:$0xf]
    %v95 = vld [vmem:[%s1 + $0x8c] sm:$0xf]
    %v96 = vld [vmem:[%s1 + $0x90] sm:$0xf]
    %v97 = vld [vmem:[%s1 + $0x94] sm:$0xf]
    %v98 = vld [vmem:[%s1 + $0x98] sm:$0xf]
    %v99 = vld [vmem:[%s1 + $0x9c] sm:$0xf]
    %v100 = vld [vmem:[%s1 + $0xa0] sm:$0xf]
    %v101 = vld [vmem:[%s1 + $0xa4] sm:$0xf]
    %v102 = vld [vmem:[%s1 + $0xa8] sm:$0xf]
    %v103 = vld [vmem:[%s1 + $0xac] sm:$0xf]
    %v104 = vld [vmem:[%s1 + $0xb0] sm:$0xf]
    %v105 = vld [vmem:[%s1 + $0xb4] sm:$0xf]
    %v106 = vld [vmem:[%s1 + $0xb8] sm:$0xf]
    %v107 = vld [vmem:[%s1 + $0xbc] sm:$0xf]
    %v108 = vld [vmem:[%s1 + $0xc0] sm:$0xf]
    %v109 = vld [vmem:[%s1 + $0xc4] sm:$0xf]
    %v110 = vld [vmem:[%s1 + $0xc8] sm:$0xf]
    %v111 = vld [vmem:[%s1 + $0xcc] sm:$0xf]
    %v112 = vld [vmem:[%s1 + $0xd0] sm:$0xf]
    %v113 = vld [vmem:[%s1 + $0xd4] sm:$0xf]
    %v114 = vld [vmem:[%s1 + $0xd8] sm:$0xf]
    %v115 = vld [vmem:[%s1 + $0xdc] sm:$0xf]
    %v116 = vld [vmem:[%s1 + $0xe0] sm:$0xf]
    %v117 = vld [vmem:[%s1 + $0xe4] sm:$0xf]
    %v118 = vld [vmem:[%s1 + $0xe8] sm:$0xf]
    %v119 = vld [vmem:[%s1 + $0xec] sm:$0xf]
    %v120 = vld [vmem:[%s1 + $0xf0] sm:$0xf]
    %v121 = vld [vmem:[%s1 + $0xf4] sm:$0xf]
    %v122 = vld [vmem:[%s1 + $0xf8] sm:$0xf]
    %v123 = vld [vmem:[%s1 + $0xfc] sm:$0xf]
    %v124 = vld [vmem:[%s1 + $0x100] sm:$0xf]
    %v125 = vld [vmem:[%s1 + $0x104] sm:$0xf]
    %v126 = vld [vmem:[%s1 + $0x108] sm:$0xf]
    %v127 = vld [vmem:[%s1 + $0x10c] sm:$0xf]
    %v128 = vld [vmem:[%s1 + $0x110] sm:$0xf]
    %v129 = vld [vmem:[%s1 + $0x114] sm:$0xf]
    %v130 = vld [vmem:[%s1 + $0x118] sm:$0xf]
    %v131 = vld [vmem:[%s1 + $0x11c] sm:$0xf]
    %v132 = vld [vmem:[%s1 + $0x120] sm:$0xf]
    %v133 = vld [vmem:[%s1 + $0x124] sm:$0xf]
    %v134 = vld [vmem:[%s1 + $0x128] sm:$0xf]
    %v135 = vld [vmem:[%s1 + $0x12c] sm:$0xf]
    %v136 = vld [vmem:[%s1 + $0x130] sm:$0xf]
    %v137 = vld [vmem:[%s1 + $0x134] sm:$0xf]
    %v138 = vld [vmem:[%s1 + $0x138] sm:$0xf]
    %v139 = vld [vmem:[%s1 + $0x13c] sm:$0xf]
    %v140 = vld [vmem:[%s1 + $0x140] sm:$0xf]
    %v141 = vld [vmem:[%s1 + $0x144] sm:$0xf]
    %v142 = vld [vmem:[%s1 + $0x148] sm:$0xf]
    %v143 = vld [vmem:[%s1 + $0x14c] sm:$0xf]
    %v144 = vld [vmem:[%s1 + $0x150] sm:$0xf]
    %v145 = vld [vmem:[%s1 + $0x154] sm:$0xf]
    %v146 = vld [vmem:[%s1 + $0x158] sm:$0xf]
    %v147 = vld [vmem:[%s1 + $0x15c] sm:$0xf]
    %v148 = vld [vmem:[%s1 + $0x160] sm:$0xf]
    %v149 = vld [vmem:[%s1 + $0x164] sm:$0xf]
    %v150 = vld [vmem:[%s1 + $0x168] sm:$0xf]
    %v151 = vld [vmem:[%s1 + $0x16c] sm:$0xf]
    %v152 = vld [vmem:[%s1 + $0x170] sm:$0xf]
    %v153 = vld [vmem:[%s1 + $0x174] sm:$0xf]
    %v154 = vld [vmem:[%s1 + $0x178] sm:$0xf]
    %v155 = vld [vmem:[%s1 + $0x17c] sm:$0xf]
    %v156 = vld [vmem:[%s1 + $0x180] sm:$0xf]
    %v157 = vld [vmem:[%s1 + $0x184] sm:$0xf]
    %v158 = vld [vmem:[%s2] sm:$0x1]
    %v160 = vlaneseq
    %v161 = vshrl.u32 %v160, 7
    %v162 = vsub.s32 0, %v161
    %v163 = vrot.slane %v158, %v162
    %v263 = vunpack.c.l.b16 %v60
    %v264 = vunpack.c.l.b16 %v61
    %v265 = vunpack.c.l.b16 %v62
    %v266 = vunpack.c.l.b16 %v63
    %v267 = vunpack.c.l.b16 %v64
    %v268 = vunpack.c.l.b16 %v65
    %v269 = vunpack.c.l.b16 %v66
    %v270 = vunpack.c.l.b16 %v67
    %v271 = vunpack.c.l.b16 %v68
    %v272 = vunpack.c.l.b16 %v69
    %v273 = vunpack.c.l.b16 %v70
    %v274 = vunpack.c.l.b16 %v71
    %v275 = vunpack.c.l.b16 %v72
    %v276 = vunpack.c.l.b16 %v73
    %v277 = vunpack.c.l.b16 %v74
    %v278 = vunpack.c.l.b16 %v75
    %v279 = vunpack.c.l.b16 %v76
    %v280 = vunpack.c.l.b16 %v77
    %v281 = vunpack.c.l.b16 %v78
    %v282 = vunpack.c.l.b16 %v79
    %v283 = vunpack.c.l.b16 %v80
    %v284 = vunpack.c.l.b16 %v81
    %v285 = vunpack.c.l.b16 %v82
    %v286 = vunpack.c.l.b16 %v83
    %v287 = vunpack.c.l.b16 %v84
    %v288 = vunpack.c.l.b16 %v85
    %v289 = vunpack.c.l.b16 %v86
    %v290 = vunpack.c.l.b16 %v87
    %v291 = vunpack.c.l.b16 %v88
    %v292 = vunpack.c.l.b16 %v89
    %v293 = vunpack.c.l.b16 %v90
    %v294 = vunpack.c.l.b16 %v91
    %v295 = vunpack.c.l.b16 %v92
    %v296 = vunpack.c.l.b16 %v93
    %v297 = vunpack.c.l.b16 %v94
    %v298 = vunpack.c.l.b16 %v95
    %v299 = vunpack.c.l.b16 %v96
    %v300 = vunpack.c.l.b16 %v97
    %v301 = vunpack.c.l.b16 %v98
    %v302 = vunpack.c.l.b16 %v99
    %v303 = vunpack.c.l.b16 %v100
    %v304 = vunpack.c.l.b16 %v101
    %v305 = vunpack.c.l.b16 %v102
    %v306 = vunpack.c.l.b16 %v103
    %v307 = vunpack.c.l.b16 %v104
    %v308 = vunpack.c.l.b16 %v105
    %v309 = vunpack.c.l.b16 %v106
    %v310 = vunpack.c.l.b16 %v107
    %v311 = vunpack.c.l.b16 %v108
    %v312 = vunpack.c.l.b16 %v109
    %v313 = vunpack.c.l.b16 %v110
    %v314 = vunpack.c.l.b16 %v111
    %v315 = vunpack.c.l.b16 %v112
    %v316 = vunpack.c.l.b16 %v113
    %v317 = vunpack.c.l.b16 %v114
    %v318 = vunpack.c.l.b16 %v115
    %v319 = vunpack.c.l.b16 %v116
    %v320 = vunpack.c.l.b16 %v117
    %v321 = vunpack.c.l.b16 %v118
    %v322 = vunpack.c.l.b16 %v119
    %v323 = vunpack.c.l.b16 %v120
    %v324 = vunpack.c.l.b16 %v121
    %v325 = vunpack.c.l.b16 %v122
    %v326 = vunpack.c.l.b16 %v123
    %v327 = vunpack.c.l.b16 %v124
    %v328 = vunpack.c.l.b16 %v125
    %v329 = vunpack.c.l.b16 %v126
    %v330 = vunpack.c.l.b16 %v127
    %v331 = vunpack.c.l.b16 %v128
    %v332 = vunpack.c.l.b16 %v129
    %v333 = vunpack.c.l.b16 %v130
    %v334 = vunpack.c.l.b16 %v131
    %v335 = vunpack.c.l.b16 %v132
    %v336 = vunpack.c.l.b16 %v133
    %v337 = vunpack.c.l.b16 %v134
    %v338 = vunpack.c.l.b16 %v135
    %v339 = vunpack.c.l.b16 %v136
    %v340 = vunpack.c.l.b16 %v137
    %v341 = vunpack.c.l.b16 %v138
    %v342 = vunpack.c.l.b16 %v139
    %v343 = vunpack.c.l.b16 %v140
    %v344 = vunpack.c.l.b16 %v141
    %v345 = vunpack.c.l.b16 %v142
    %v346 = vunpack.c.l.b16 %v143
    %v347 = vunpack.c.l.b16 %v144
    %v348 = vunpack.c.l.b16 %v145
    %v349 = vunpack.c.l.b16 %v146
    %v350 = vunpack.c.l.b16 %v147
    %v351 = vunpack.c.l.b16 %v148
    %v352 = vunpack.c.l.b16 %v149
    %v353 = vunpack.c.l.b16 %v150
    %v354 = vunpack.c.l.b16 %v151
    %v355 = vunpack.c.l.b16 %v152
    %v356 = vunpack.c.l.b16 %v153
    %v357 = vunpack.c.l.b16 %v154
    %v358 = vunpack.c.l.b16 %v155
    %v359 = vunpack.c.l.b16 %v156
    %v360 = vunpack.c.l.b16 %v157
    %v361 = vpack.c.b16 %v264, %v263
    %v362 = vpack.c.b16 %v266, %v265
    %v363 = vpack.c.b16 %v268, %v267
    %v364 = vpack.c.b16 %v270, %v269
    %v365 = vpack.c.b16 %v272, %v271
    %v366 = vpack.c.b16 %v274, %v273
    %v367 = vpack.c.b16 %v276, %v275
    %v368 = vpack.c.b16 %v278, %v277
    %v369 = vpack.c.b16 %v280, %v279
    %v370 = vpack.c.b16 %v282, %v281
    %v371 = vpack.c.b16 %v284, %v283
    %v372 = vpack.c.b16 %v286, %v285
    %v373 = vpack.c.b16 %v288, %v287
    %v374 = vpack.c.b16 %v290, %v289
    %v375 = vpack.c.b16 %v292, %v291
    %v376 = vpack.c.b16 %v294, %v293
    %v377 = vpack.c.b16 %v296, %v295
    %v378 = vpack.c.b16 %v298, %v297
    %v379 = vpack.c.b16 %v300, %v299
    %v380 = vpack.c.b16 %v302, %v301
    %v381 = vpack.c.b16 %v304, %v303
    %v382 = vpack.c.b16 %v306, %v305
    %v383 = vpack.c.b16 %v308, %v307
    %v384 = vpack.c.b16 %v310, %v309
    %v385 = vpack.c.b16 %v312, %v311
    %v386 = vpack.c.b16 %v314, %v313
    %v387 = vpack.c.b16 %v316, %v315
    %v388 = vpack.c.b16 %v318, %v317
    %v389 = vpack.c.b16 %v320, %v319
    %v390 = vpack.c.b16 %v322, %v321
    %v391 = vpack.c.b16 %v324, %v323
    %v392 = vpack.c.b16 %v326, %v325
    %v393 = vpack.c.b16 %v328, %v327
    %v394 = vpack.c.b16 %v330, %v329
    %v395 = vpack.c.b16 %v332, %v331
    %v396 = vpack.c.b16 %v334, %v333
    %v397 = vpack.c.b16 %v336, %v335
    %v398 = vpack.c.b16 %v338, %v337
    %v399 = vpack.c.b16 %v340, %v339
    %v400 = vpack.c.b16 %v342, %v341
    %v401 = vpack.c.b16 %v344, %v343
    %v402 = vpack.c.b16 %v346, %v345
    %v403 = vpack.c.b16 %v348, %v347
    %v404 = vpack.c.b16 %v350, %v349
    %v405 = vpack.c.b16 %v352, %v351
    %v406 = vpack.c.b16 %v354, %v353
    %v407 = vpack.c.b16 %v356, %v355
    %v408 = vpack.c.b16 %v358, %v357
    %v409 = vpack.c.b16 %v360, %v359
    %vm459 = vcmask 130048
    %v461 = vsel %vm459, %v59, 0
    %463 = vmatprep.subr.bf16.mxu0 0
    %464 = vmatpush1.bf16.msra.mxu0 %v368
    %465 = vmatprep.subr.bf16.mxu0 0
    %466 = vmatpush1.bf16.msra.mxu0 %v367
    %467 = vmatprep.subr.bf16.mxu0 0
    %468 = vmatpush1.bf16.msra.mxu0 %v366
    %469 = vmatprep.subr.bf16.mxu0 0
    %470 = vmatpush1.bf16.msra.mxu0 %v365
    %471 = vmatprep.subr.bf16.mxu0 0
    %472 = vmatpush1.bf16.msra.mxu0 %v364
    %473 = vmatprep.subr.bf16.mxu0 0
    %474 = vmatpush1.bf16.msra.mxu0 %v363
    %475 = vmatprep.subr.bf16.mxu0 0
    %476 = vmatpush1.bf16.msra.mxu0 %v362
    %477 = vmatprep.subr.bf16.mxu0 0
    %478 = vmatpush1.bf16.msra.mxu0 %v361
    %479 = vmatprep.subr.bf16.mxu0 0
    %480 = vmatpush2.bf16.msra.mxu0 %v376
    %481 = vmatprep.subr.bf16.mxu0 0
    %482 = vmatpush2.bf16.msra.mxu0 %v375
    %483 = vmatprep.subr.bf16.mxu0 0
    %484 = vmatpush2.bf16.msra.mxu0 %v374
    %485 = vmatprep.subr.bf16.mxu0 0
    %486 = vmatpush2.bf16.msra.mxu0 %v373
    %487 = vmatprep.subr.bf16.mxu0 0
    %488 = vmatpush2.bf16.msra.mxu0 %v372
    %489 = vmatprep.subr.bf16.mxu0 0
    %490 = vmatpush2.bf16.msra.mxu0 %v371
    %491 = vmatprep.subr.bf16.mxu0 0
    %492 = vmatpush2.bf16.msra.mxu0 %v370
    %493 = vmatprep.subr.bf16.mxu0 0
    %494 = vmatpush2.bf16.msra.mxu0 %v369
    %495 = vmatprep.mubr.bf16.mxu0 %v54
    %496 = vmatmul.mubr.bf16.gmra.mxu0 %v53
    %v497 = vpop.f32.mrf.mxu0
    %v498 = vadd.f32 %v163, %v497
    %v499 = vpop.f32.mrf.mxu0
    %v500 = vpop.f32.mrf.mxu0
    %v501 = vpop.f32.mrf.mxu0
    %502 = vdwg.mxu0
    %503 = vmatprep.subr.bf16.mxu0 0
    %504 = vmatpush1.bf16.msra.mxu0 %v384
    %505 = vmatprep.subr.bf16.mxu0 0
    %506 = vmatpush1.bf16.msra.mxu0 %v383
    %507 = vmatprep.subr.bf16.mxu0 0
    %508 = vmatpush1.bf16.msra.mxu0 %v382
    %509 = vmatprep.subr.bf16.mxu0 0
    %510 = vmatpush1.bf16.msra.mxu0 %v381
    %511 = vmatprep.subr.bf16.mxu0 0
    %512 = vmatpush1.bf16.msra.mxu0 %v380
    %513 = vmatprep.subr.bf16.mxu0 0
    %514 = vmatpush1.bf16.msra.mxu0 %v379
    %515 = vmatprep.subr.bf16.mxu0 0
    %516 = vmatpush1.bf16.msra.mxu0 %v378
    %517 = vmatprep.subr.bf16.mxu0 0
    %518 = vmatpush1.bf16.msra.mxu0 %v377
    %519 = vmatprep.subr.bf16.mxu0 0
    %520 = vmatpush2.bf16.msra.mxu0 %v392
    %521 = vmatprep.subr.bf16.mxu0 0
    %522 = vmatpush2.bf16.msra.mxu0 %v391
    %523 = vmatprep.subr.bf16.mxu0 0
    %524 = vmatpush2.bf16.msra.mxu0 %v390
    %525 = vmatprep.subr.bf16.mxu0 0
    %526 = vmatpush2.bf16.msra.mxu0 %v389
    %527 = vmatprep.subr.bf16.mxu0 0
    %528 = vmatpush2.bf16.msra.mxu0 %v388
    %529 = vmatprep.subr.bf16.mxu0 0
    %530 = vmatpush2.bf16.msra.mxu0 %v387
    %531 = vmatprep.subr.bf16.mxu0 0
    %532 = vmatpush2.bf16.msra.mxu0 %v386
    %533 = vmatprep.subr.bf16.mxu0 0
    %534 = vmatpush2.bf16.msra.mxu0 %v385
    %535 = vmatprep.mubr.bf16.mxu0 %v56
    %536 = vmatmul.mubr.bf16.gmra.mxu0 %v55
    %v537 = vpop.f32.mrf.mxu0
    %v538 = vadd.f32 %v498, %v537
    %v539 = vpop.f32.mrf.mxu0
    %v540 = vpop.f32.mrf.mxu0
    %v541 = vpop.f32.mrf.mxu0
    %542 = vdwg.mxu0
    %543 = vmatprep.subr.bf16.mxu0 0
    %544 = vmatpush1.bf16.msra.mxu0 %v400
    %545 = vmatprep.subr.bf16.mxu0 0
    %546 = vmatpush1.bf16.msra.mxu0 %v399
    %547 = vmatprep.subr.bf16.mxu0 0
    %548 = vmatpush1.bf16.msra.mxu0 %v398
    %549 = vmatprep.subr.bf16.mxu0 0
    %550 = vmatpush1.bf16.msra.mxu0 %v397
    %551 = vmatprep.subr.bf16.mxu0 0
    %552 = vmatpush1.bf16.msra.mxu0 %v396
    %553 = vmatprep.subr.bf16.mxu0 0
    %554 = vmatpush1.bf16.msra.mxu0 %v395
    %555 = vmatprep.subr.bf16.mxu0 0
    %556 = vmatpush1.bf16.msra.mxu0 %v394
    %557 = vmatprep.subr.bf16.mxu0 0
    %558 = vmatpush1.bf16.msra.mxu0 %v393
    %559 = vmatprep.subr.bf16.mxu0 0
    %560 = vmatpush2.bf16.msra.mxu0 %v408
    %561 = vmatprep.subr.bf16.mxu0 0
    %562 = vmatpush2.bf16.msra.mxu0 %v407
    %563 = vmatprep.subr.bf16.mxu0 0
    %564 = vmatpush2.bf16.msra.mxu0 %v406
    %565 = vmatprep.subr.bf16.mxu0 0
    %566 = vmatpush2.bf16.msra.mxu0 %v405
    %567 = vmatprep.subr.bf16.mxu0 0
    %568 = vmatpush2.bf16.msra.mxu0 %v404
    %569 = vmatprep.subr.bf16.mxu0 0
    %570 = vmatpush2.bf16.msra.mxu0 %v403
    %571 = vmatprep.subr.bf16.mxu0 0
    %572 = vmatpush2.bf16.msra.mxu0 %v402
    %573 = vmatprep.subr.bf16.mxu0 0
    %574 = vmatpush2.bf16.msra.mxu0 %v401
    %575 = vmatprep.mubr.bf16.mxu0 %v58
    %576 = vmatmul.mubr.bf16.gmra.mxu0 %v57
    %v577 = vpop.f32.mrf.mxu0
    %v578 = vadd.f32 %v538, %v577
    %v579 = vpop.f32.mrf.mxu0
    %v580 = vpop.f32.mrf.mxu0
    %v581 = vpop.f32.mrf.mxu0
    %582 = vdwg.mxu0
    %583 = vmatprep.subr.bf16.mxu0 0
    %584 = vmatpush1.bf16.msra.mxu0 0
    %585 = vmatprep.subr.bf16.mxu0 0
    %586 = vmatpush1.bf16.msra.mxu0 0
    %587 = vmatprep.subr.bf16.mxu0 0
    %588 = vmatpush1.bf16.msra.mxu0 0
    %589 = vmatprep.subr.bf16.mxu0 0
    %590 = vmatpush1.bf16.msra.mxu0 0
    %591 = vmatprep.subr.bf16.mxu0 0
    %592 = vmatpush1.bf16.msra.mxu0 0
    %593 = vmatprep.subr.bf16.mxu0 0
    %594 = vmatpush1.bf16.msra.mxu0 0
    %595 = vmatprep.subr.bf16.mxu0 0
    %596 = vmatpush1.bf16.msra.mxu0 0
    %597 = vmatprep.subr.bf16.mxu0 0
    %598 = vmatpush1.bf16.msra.mxu0 %v409
    %599 = vmatprep.subr.bf16.mxu0 0
    %600 = vmatpush2.bf16.msra.mxu0 0
    %601 = vmatprep.subr.bf16.mxu0 0
    %602 = vmatpush2.bf16.msra.mxu0 0
    %603 = vmatprep.subr.bf16.mxu0 0
    %604 = vmatpush2.bf16.msra.mxu0 0
    %605 = vmatprep.subr.bf16.mxu0 0
    %606 = vmatpush2.bf16.msra.mxu0 0
    %607 = vmatprep.subr.bf16.mxu0 0
    %608 = vmatpush2.bf16.msra.mxu0 0
    %609 = vmatprep.subr.bf16.mxu0 0
    %610 = vmatpush2.bf16.msra.mxu0 0
    %611 = vmatprep.subr.bf16.mxu0 0
    %612 = vmatpush2.bf16.msra.mxu0 0
    %613 = vmatprep.subr.bf16.mxu0 0
    %614 = vmatpush2.bf16.msra.mxu0 0
    %615 = vmatprep.mubr.bf16.mxu0 0
    %616 = vmatmul.mubr.bf16.gmra.mxu0 %v461
    %v617 = vpop.f32.mrf.mxu0
    %v618 = vadd.f32 %v578, %v617
    %v619 = vpop.f32.mrf.mxu0
    %v620 = vpop.f32.mrf.mxu0
    %v621 = vpop.f32.mrf.mxu0
    %622 = vdwg.mxu0
    %v623 = vmax.f32 %v618, 0.0
    %v624 = vpack.c.bf16 %v623, %v623
    %v625 = vld [vmem:[%s3] sm:$0xf]
    %v626 = vld [vmem:[%s3 + $0x4] sm:$0xf]
    %v627 = vld [vmem:[%s3 + $0x8] sm:$0xf]
    %v628 = vld [vmem:[%s3 + $0xc] sm:$0xf]
    %v629 = vld [vmem:[%s3 + $0x10] sm:$0xf]
    %v630 = vld [vmem:[%s3 + $0x14] sm:$0xf]
    %v631 = vld [vmem:[%s3 + $0x18] sm:$0xf]
    %v632 = vld [vmem:[%s3 + $0x1c] sm:$0xf]
    %v633 = vld [vmem:[%s3 + $0x20] sm:$0xf]
    %v634 = vld [vmem:[%s3 + $0x24] sm:$0xf]
    %v635 = vld [vmem:[%s3 + $0x28] sm:$0xf]
    %v636 = vld [vmem:[%s3 + $0x2c] sm:$0xf]
    %v637 = vld [vmem:[%s3 + $0x30] sm:$0xf]
    %v638 = vld [vmem:[%s3 + $0x34] sm:$0xf]
    %v639 = vld [vmem:[%s3 + $0x38] sm:$0xf]
    %v640 = vld [vmem:[%s3 + $0x3c] sm:$0xf]
    %v641 = vld [vmem:[%s4] sm:$0x1]
    %v643 = vlaneseq
    %v644 = vshrl.u32 %v643, 7
    %v645 = vsub.s32 0, %v644
    %v646 = vrot.slane %v641, %v645
    %v664 = vunpack.c.l.b16 %v625
    %v665 = vunpack.c.l.b16 %v626
    %v666 = vunpack.c.l.b16 %v627
    %v667 = vunpack.c.l.b16 %v628
    %v668 = vunpack.c.l.b16 %v629
    %v669 = vunpack.c.l.b16 %v630
    %v670 = vunpack.c.l.b16 %v631
    %v671 = vunpack.c.l.b16 %v632
    %v672 = vunpack.c.l.b16 %v633
    %v673 = vunpack.c.l.b16 %v634
    %v674 = vunpack.c.l.b16 %v635
    %v675 = vunpack.c.l.b16 %v636
    %v676 = vunpack.c.l.b16 %v637
    %v677 = vunpack.c.l.b16 %v638
    %v678 = vunpack.c.l.b16 %v639
    %v679 = vunpack.c.l.b16 %v640
    %v680 = vpack.c.b16 %v665, %v664
    %v681 = vpack.c.b16 %v667, %v666
    %v682 = vpack.c.b16 %v669, %v668
    %v683 = vpack.c.b16 %v671, %v670
    %v684 = vpack.c.b16 %v673, %v672
    %v685 = vpack.c.b16 %v675, %v674
    %v686 = vpack.c.b16 %v677, %v676
    %v687 = vpack.c.b16 %v679, %v678
    %696 = vmatprep.subr.bf16.mxu0 0
    %697 = vmatpush1.bf16.msra.mxu0 %v687
    %698 = vmatprep.subr.bf16.mxu0 0
    %699 = vmatpush1.bf16.msra.mxu0 %v686
    %700 = vmatprep.subr.bf16.mxu0 0
    %701 = vmatpush1.bf16.msra.mxu0 %v685
    %702 = vmatprep.subr.bf16.mxu0 0
    %703 = vmatpush1.bf16.msra.mxu0 %v684
    %704 = vmatprep.subr.bf16.mxu0 0
    %705 = vmatpush1.bf16.msra.mxu0 %v683
    %706 = vmatprep.subr.bf16.mxu0 0
    %707 = vmatpush1.bf16.msra.mxu0 %v682
    %708 = vmatprep.subr.bf16.mxu0 0
    %709 = vmatpush1.bf16.msra.mxu0 %v681
    %710 = vmatprep.subr.bf16.mxu0 0
    %711 = vmatpush1.bf16.msra.mxu0 %v680
    %712 = vmatprep.subr.bf16.mxu0 0
    %713 = vmatpush2.bf16.msra.mxu0 0
    %714 = vmatprep.subr.bf16.mxu0 0
    %715 = vmatpush2.bf16.msra.mxu0 0
    %716 = vmatprep.subr.bf16.mxu0 0
    %717 = vmatpush2.bf16.msra.mxu0 0
    %718 = vmatprep.subr.bf16.mxu0 0
    %719 = vmatpush2.bf16.msra.mxu0 0
    %720 = vmatprep.subr.bf16.mxu0 0
    %721 = vmatpush2.bf16.msra.mxu0 0
    %722 = vmatprep.subr.bf16.mxu0 0
    %723 = vmatpush2.bf16.msra.mxu0 0
    %724 = vmatprep.subr.bf16.mxu0 0
    %725 = vmatpush2.bf16.msra.mxu0 0
    %726 = vmatprep.subr.bf16.mxu0 0
    %727 = vmatpush2.bf16.msra.mxu0 0
    %728 = vmatprep.mubr.bf16.mxu0 0
    %729 = vmatmul.mubr.bf16.gmra.mxu0 %v624
    %v730 = vpop.f32.mrf.mxu0
    %v731 = vadd.f32 %v646, %v730
    %v732 = vpop.f32.mrf.mxu0
    %v733 = vpop.f32.mrf.mxu0
    %v734 = vpop.f32.mrf.mxu0
    %735 = vdwg.mxu0
    %v736 = vmax.f32 %v731, 0.0
    %v737 = vpack.c.bf16 %v736, %v736
    %v738 = vld [vmem:[%s5] sm:$0xf]
    %v739 = vld [vmem:[%s5 + $0x4] sm:$0xf]
    %v740 = vld [vmem:[%s5 + $0x8] sm:$0xf]
    %v741 = vld [vmem:[%s5 + $0xc] sm:$0xf]
    %v742 = vld [vmem:[%s5 + $0x10] sm:$0xf]
    %v743 = vld [vmem:[%s5 + $0x14] sm:$0xf]
    %v744 = vld [vmem:[%s5 + $0x18] sm:$0xf]
    %v745 = vld [vmem:[%s5 + $0x1c] sm:$0xf]
    %v746 = vld [vmem:[%s6] sm:$0x1]
    %v748 = vlaneseq
    %v749 = vshrl.u32 %v748, 7
    %v750 = vsub.s32 0, %v749
    %v751 = vrot.slane %v746, %v750
    %v761 = vunpack.c.l.b16 %v738
    %v762 = vunpack.c.l.b16 %v739
    %v763 = vunpack.c.l.b16 %v740
    %v764 = vunpack.c.l.b16 %v741
    %v765 = vunpack.c.l.b16 %v742
    %v766 = vunpack.c.l.b16 %v743
    %v767 = vunpack.c.l.b16 %v744
    %v768 = vunpack.c.l.b16 %v745
    %v769 = vpack.c.b16 %v762, %v761
    %v770 = vpack.c.b16 %v764, %v763
    %v771 = vpack.c.b16 %v766, %v765
    %v772 = vpack.c.b16 %v768, %v767
    %vm777 = vcmask 523264
    %v779 = vsel %vm777, %v737, 0
    %781 = vmatprep.subr.bf16.mxu0 0
    %782 = vmatpush1.bf16.msra.mxu0 0
    %783 = vmatprep.subr.bf16.mxu0 0
    %784 = vmatpush1.bf16.msra.mxu0 0
    %785 = vmatprep.subr.bf16.mxu0 0
    %786 = vmatpush1.bf16.msra.mxu0 0
    %787 = vmatprep.subr.bf16.mxu0 0
    %788 = vmatpush1.bf16.msra.mxu0 0
    %789 = vmatprep.subr.bf16.mxu0 0
    %790 = vmatpush1.bf16.msra.mxu0 %v772
    %791 = vmatprep.subr.bf16.mxu0 0
    %792 = vmatpush1.bf16.msra.mxu0 %v771
    %793 = vmatprep.subr.bf16.mxu0 0
    %794 = vmatpush1.bf16.msra.mxu0 %v770
    %795 = vmatprep.subr.bf16.mxu0 0
    %796 = vmatpush1.bf16.msra.mxu0 %v769
    %797 = vmatprep.subr.bf16.mxu0 0
    %798 = vmatpush2.bf16.msra.mxu0 0
    %799 = vmatprep.subr.bf16.mxu0 0
    %800 = vmatpush2.bf16.msra.mxu0 0
    %801 = vmatprep.subr.bf16.mxu0 0
    %802 = vmatpush2.bf16.msra.mxu0 0
    %803 = vmatprep.subr.bf16.mxu0 0
    %804 = vmatpush2.bf16.msra.mxu0 0
    %805 = vmatprep.subr.bf16.mxu0 0
    %806 = vmatpush2.bf16.msra.mxu0 0
    %807 = vmatprep.subr.bf16.mxu0 0
    %808 = vmatpush2.bf16.msra.mxu0 0
    %809 = vmatprep.subr.bf16.mxu0 0
    %810 = vmatpush2.bf16.msra.mxu0 0
    %811 = vmatprep.subr.bf16.mxu0 0
    %812 = vmatpush2.bf16.msra.mxu0 0
    %813 = vmatprep.mubr.bf16.mxu0 0
    %814 = vmatmul.mubr.bf16.gmra.mxu0 %v779
    %v815 = vpop.f32.mrf.mxu0
    %v816 = vadd.f32 %v751, %v815
    %v817 = vpop.f32.mrf.mxu0
    %v818 = vpop.f32.mrf.mxu0
    %v819 = vpop.f32.mrf.mxu0
    %820 = vdwg.mxu0
    %v821 = vpack.c.bf16 %v816, %v816
    %v822 = vld [vmem:[%s7] sm:$0xf]
    %v823 = vld [vmem:[%s7 + $0x4] sm:$0xf]
    %v824 = vld [vmem:[%s7 + $0x8] sm:$0xf]
    %v825 = vld [vmem:[%s7 + $0xc] sm:$0xf]
    %v826 = vld [vmem:[%s8] sm:$0x1]
    %v828 = vlaneseq
    %v829 = vshrl.u32 %v828, 7
    %v830 = vsub.s32 0, %v829
    %v831 = vrot.slane %v826, %v830
    %v837 = vunpack.c.l.b16 %v822
    %v838 = vunpack.c.l.b16 %v823
    %v839 = vunpack.c.l.b16 %v824
    %v840 = vunpack.c.l.b16 %v825
    %v841 = vpack.c.b16 %v838, %v837
    %v842 = vpack.c.b16 %v840, %v839
    %vm845 = vcmask 261120
    %v847 = vsel %vm845, %v821, 0
    %849 = vmatprep.subr.bf16.mxu0 0
    %850 = vmatpush1.bf16.msra.mxu0 0
    %851 = vmatprep.subr.bf16.mxu0 0
    %852 = vmatpush1.bf16.msra.mxu0 0
    %853 = vmatprep.subr.bf16.mxu0 0
    %854 = vmatpush1.bf16.msra.mxu0 0
    %855 = vmatprep.subr.bf16.mxu0 0
    %856 = vmatpush1.bf16.msra.mxu0 0
    %857 = vmatprep.subr.bf16.mxu0 0
    %858 = vmatpush1.bf16.msra.mxu0 0
    %859 = vmatprep.subr.bf16.mxu0 0
    %860 = vmatpush1.bf16.msra.mxu0 0
    %861 = vmatprep.subr.bf16.mxu0 0
    %862 = vmatpush1.bf16.msra.mxu0 %v842
    %863 = vmatprep.subr.bf16.mxu0 0
    %864 = vmatpush1.bf16.msra.mxu0 %v841
    %865 = vmatprep.subr.bf16.mxu0 0
    %866 = vmatpush2.bf16.msra.mxu0 0
    %867 = vmatprep.subr.bf16.mxu0 0
    %868 = vmatpush2.bf16.msra.mxu0 0
    %869 = vmatprep.subr.bf16.mxu0 0
    %870 = vmatpush2.bf16.msra.mxu0 0
    %871 = vmatprep.subr.bf16.mxu0 0
    %872 = vmatpush2.bf16.msra.mxu0 0
    %873 = vmatprep.subr.bf16.mxu0 0
    %874 = vmatpush2.bf16.msra.mxu0 0
    %875 = vmatprep.subr.bf16.mxu0 0
    %876 = vmatpush2.bf16.msra.mxu0 0
    %877 = vmatprep.subr.bf16.mxu0 0
    %878 = vmatpush2.bf16.msra.mxu0 0
    %879 = vmatprep.subr.bf16.mxu0 0
    %880 = vmatpush2.bf16.msra.mxu0 0
    %881 = vmatprep.mubr.bf16.mxu0 0
    %882 = vmatmul.mubr.bf16.gmra.mxu0 %v847
    %v883 = vpop.f32.mrf.mxu0
    %v884 = vadd.f32 %v831, %v883
    %v885 = vpop.f32.mrf.mxu0
    %v886 = vpop.f32.mrf.mxu0
    %v887 = vpop.f32.mrf.mxu0
    %888 = vdwg.mxu0
    %v889 = vmax.f32 %v884, 0.0
    %v890 = vpack.c.bf16 %v889, %v889
    %v891 = vld [vmem:[%s9] sm:$0xf]
    %v892 = vld [vmem:[%s9 + $0x4] sm:$0xf]
    %v893 = vld [vmem:[%s9 + $0x8] sm:$0xf]
    %v894 = vld [vmem:[%s9 + $0xc] sm:$0xf]
    %v895 = vld [vmem:[%s9 + $0x10] sm:$0xf]
    %v896 = vld [vmem:[%s9 + $0x14] sm:$0xf]
    %v897 = vld [vmem:[%s9 + $0x18] sm:$0xf]
    %v898 = vld [vmem:[%s9 + $0x1c] sm:$0xf]
    %v899 = vld [vmem:[%s10] sm:$0x1]
    %v901 = vlaneseq
    %v902 = vshrl.u32 %v901, 7
    %v903 = vsub.s32 0, %v902
    %v904 = vrot.slane %v899, %v903
    %v914 = vunpack.c.l.b16 %v891
    %v915 = vunpack.c.l.b16 %v892
    %v916 = vunpack.c.l.b16 %v893
    %v917 = vunpack.c.l.b16 %v894
    %v918 = vunpack.c.l.b16 %v895
    %v919 = vunpack.c.l.b16 %v896
    %v920 = vunpack.c.l.b16 %v897
    %v921 = vunpack.c.l.b16 %v898
    %v922 = vpack.c.b16 %v915, %v914
    %v923 = vpack.c.b16 %v917, %v916
    %v924 = vpack.c.b16 %v919, %v918
    %v925 = vpack.c.b16 %v921, %v920
    %v931 = vsel %vm777, %v890, 0
    %933 = vmatprep.subr.bf16.mxu0 0
    %934 = vmatpush1.bf16.msra.mxu0 0
    %935 = vmatprep.subr.bf16.mxu0 0
    %936 = vmatpush1.bf16.msra.mxu0 0
    %937 = vmatprep.subr.bf16.mxu0 0
    %938 = vmatpush1.bf16.msra.mxu0 0
    %939 = vmatprep.subr.bf16.mxu0 0
    %940 = vmatpush1.bf16.msra.mxu0 0
    %941 = vmatprep.subr.bf16.mxu0 0
    %942 = vmatpush1.bf16.msra.mxu0 %v925
    %943 = vmatprep.subr.bf16.mxu0 0
    %944 = vmatpush1.bf16.msra.mxu0 %v924
    %945 = vmatprep.subr.bf16.mxu0 0
    %946 = vmatpush1.bf16.msra.mxu0 %v923
    %947 = vmatprep.subr.bf16.mxu0 0
    %948 = vmatpush1.bf16.msra.mxu0 %v922
    %949 = vmatprep.subr.bf16.mxu0 0
    %950 = vmatpush2.bf16.msra.mxu0 0
    %951 = vmatprep.subr.bf16.mxu0 0
    %952 = vmatpush2.bf16.msra.mxu0 0
    %953 = vmatprep.subr.bf16.mxu0 0
    %954 = vmatpush2.bf16.msra.mxu0 0
    %955 = vmatprep.subr.bf16.mxu0 0
    %956 = vmatpush2.bf16.msra.mxu0 0
    %957 = vmatprep.subr.bf16.mxu0 0
    %958 = vmatpush2.bf16.msra.mxu0 0
    %959 = vmatprep.subr.bf16.mxu0 0
    %960 = vmatpush2.bf16.msra.mxu0 0
    %961 = vmatprep.subr.bf16.mxu0 0
    %962 = vmatpush2.bf16.msra.mxu0 0
    %963 = vmatprep.subr.bf16.mxu0 0
    %964 = vmatpush2.bf16.msra.mxu0 0
    %965 = vmatprep.mubr.bf16.mxu0 0
    %966 = vmatmul.mubr.bf16.gmra.mxu0 %v931
    %v967 = vpop.f32.mrf.mxu0
    %v968 = vadd.f32 %v904, %v967
    %v969 = vpop.f32.mrf.mxu0
    %v970 = vpop.f32.mrf.mxu0
    %v971 = vpop.f32.mrf.mxu0
    %972 = vdwg.mxu0
    %v973 = vmax.f32 %v968, 0.0
    %v974 = vpack.c.bf16 %v973, %v973
    %v975 = vld [vmem:[%s11] sm:$0xff]
    %v976 = vld [vmem:[%s11 + $0x8] sm:$0xff]
    %v977 = vld [vmem:[%s11 + $0x10] sm:$0xff]
    %v978 = vld [vmem:[%s11 + $0x18] sm:$0xf]
    %v979 = vld [vmem:[%s11 + $0x1c] sm:$0xff]
    %v980 = vld [vmem:[%s11 + $0x24] sm:$0xff]
    %v981 = vld [vmem:[%s11 + $0x2c] sm:$0xff]
    %v982 = vld [vmem:[%s11 + $0x34] sm:$0xf]
    %v983 = vld [vmem:[%s11 + $0x38] sm:$0xff]
    %v984 = vld [vmem:[%s11 + $0x40] sm:$0xff]
    %v985 = vld [vmem:[%s11 + $0x48] sm:$0xff]
    %v986 = vld [vmem:[%s11 + $0x50] sm:$0xf]
    %v987 = vld [vmem:[%s11 + $0x54] sm:$0xff]
    %v988 = vld [vmem:[%s11 + $0x5c] sm:$0xff]
    %v989 = vld [vmem:[%s11 + $0x64] sm:$0xff]
    %v990 = vld [vmem:[%s11 + $0x6c] sm:$0xf]
    %v991 = vld [vmem:[%s11 + $0x70] sm:$0xff]
    %v992 = vld [vmem:[%s11 + $0x78] sm:$0xff]
    %v993 = vld [vmem:[%s11 + $0x80] sm:$0xff]
    %v994 = vld [vmem:[%s11 + $0x88] sm:$0xf]
    %v995 = vld [vmem:[%s11 + $0x8c] sm:$0xff]
    %v996 = vld [vmem:[%s11 + $0x94] sm:$0xff]
    %v997 = vld [vmem:[%s11 + $0x9c] sm:$0xff]
    %v998 = vld [vmem:[%s11 + $0xa4] sm:$0xf]
    %v999 = vld [vmem:[%s11 + $0xa8] sm:$0xff]
    %v1000 = vld [vmem:[%s11 + $0xb0] sm:$0xff]
    %v1001 = vld [vmem:[%s11 + $0xb8] sm:$0xff]
    %v1002 = vld [vmem:[%s11 + $0xc0] sm:$0xf]
    %v1003 = vld [vmem:[%s11 + $0xc4] sm:$0xff]
    %v1004 = vld [vmem:[%s11 + $0xcc] sm:$0xff]
    %v1005 = vld [vmem:[%s11 + $0xd4] sm:$0xff]
    %v1006 = vld [vmem:[%s11 + $0xdc] sm:$0xf]
    %v1007 = vld [vmem:[%s11 + $0xe0] sm:$0xff]
    %v1008 = vld [vmem:[%s11 + $0xe8] sm:$0xff]
    %v1009 = vld [vmem:[%s11 + $0xf0] sm:$0xff]
    %v1010 = vld [vmem:[%s11 + $0xf8] sm:$0xf]
    %v1011 = vld [vmem:[%s11 + $0xfc] sm:$0xff]
    %v1012 = vld [vmem:[%s11 + $0x104] sm:$0xff]
    %v1013 = vld [vmem:[%s11 + $0x10c] sm:$0xff]
    %v1014 = vld [vmem:[%s11 + $0x114] sm:$0xf]
    %v1015 = vld [vmem:[%s11 + $0x118] sm:$0xff]
    %v1016 = vld [vmem:[%s11 + $0x120] sm:$0xff]
    %v1017 = vld [vmem:[%s11 + $0x128] sm:$0xff]
    %v1018 = vld [vmem:[%s11 + $0x130] sm:$0xf]
    %v1019 = vld [vmem:[%s11 + $0x134] sm:$0xff]
    %v1020 = vld [vmem:[%s11 + $0x13c] sm:$0xff]
    %v1021 = vld [vmem:[%s11 + $0x144] sm:$0xff]
    %v1022 = vld [vmem:[%s11 + $0x14c] sm:$0xf]
    %v1023 = vld [vmem:[%s11 + $0x150] sm:$0xff]
    %v1024 = vld [vmem:[%s11 + $0x158] sm:$0xff]
    %v1025 = vld [vmem:[%s11 + $0x160] sm:$0xff]
    %v1026 = vld [vmem:[%s11 + $0x168] sm:$0xf]
    %v1027 = vld [vmem:[%s11 + $0x16c] sm:$0xff]
    %v1028 = vld [vmem:[%s11 + $0x174] sm:$0xff]
    %v1029 = vld [vmem:[%s11 + $0x17c] sm:$0xff]
    %v1030 = vld [vmem:[%s11 + $0x184] sm:$0xf]
    %v1031 = vld [vmem:[%s11 + $0x188] sm:$0xff]
    %v1032 = vld [vmem:[%s11 + $0x190] sm:$0xff]
    %v1033 = vld [vmem:[%s11 + $0x198] sm:$0xff]
    %v1034 = vld [vmem:[%s11 + $0x1a0] sm:$0xf]
    %v1035 = vld [vmem:[%s11 + $0x1a4] sm:$0xff]
    %v1036 = vld [vmem:[%s11 + $0x1ac] sm:$0xff]
    %v1037 = vld [vmem:[%s11 + $0x1b4] sm:$0xff]
    %v1038 = vld [vmem:[%s11 + $0x1bc] sm:$0xf]
    %v1039 = vld [vmem:[%s12] sm:$0x7f]
    %v1041 = vlaneseq
    %v1042 = vshrl.u32 %v1041, 7
    %v1043 = vsub.s32 0, %v1042
    %v1044 = vrot.slane %v1039, %v1043
    %v1045 = vlaneseq
    %v1046 = vshrl.u32 %v1045, 7
    %v1047 = vsub.s32 1, %v1046
    %v1048 = vrot.slane %v1039, %v1047
    %v1049 = vlaneseq
    %v1050 = vshrl.u32 %v1049, 7
    %v1051 = vsub.s32 2, %v1050
    %v1052 = vrot.slane %v1039, %v1051
    %v1053 = vlaneseq
    %v1054 = vshrl.u32 %v1053, 7
    %v1055 = vsub.s32 3, %v1054
    %v1056 = vrot.slane %v1039, %v1055
    %v1057 = vlaneseq
    %v1058 = vshrl.u32 %v1057, 7
    %v1059 = vsub.s32 4, %v1058
    %v1060 = vrot.slane %v1039, %v1059
    %v1061 = vlaneseq
    %v1062 = vshrl.u32 %v1061, 7
    %v1063 = vsub.s32 5, %v1062
    %v1064 = vrot.slane %v1039, %v1063
    %v1065 = vlaneseq
    %v1066 = vshrl.u32 %v1065, 7
    %v1067 = vsub.s32 6, %v1066
    %v1068 = vrot.slane %v1039, %v1067
    %v1140 = vunpack.c.l.b16 %v975
    %v1141 = vunpack.c.h.b16 %v975
    %v1142 = vunpack.c.l.b16 %v976
    %v1143 = vunpack.c.h.b16 %v976
    %v1144 = vunpack.c.l.b16 %v977
    %v1145 = vunpack.c.h.b16 %v977
    %v1146 = vunpack.c.l.b16 %v978
    %v1147 = vunpack.c.l.b16 %v979
    %v1148 = vunpack.c.h.b16 %v979
    %v1149 = vunpack.c.l.b16 %v980
    %v1150 = vunpack.c.h.b16 %v980
    %v1151 = vunpack.c.l.b16 %v981
    %v1152 = vunpack.c.h.b16 %v981
    %v1153 = vunpack.c.l.b16 %v982
    %v1154 = vunpack.c.l.b16 %v983
    %v1155 = vunpack.c.h.b16 %v983
    %v1156 = vunpack.c.l.b16 %v984
    %v1157 = vunpack.c.h.b16 %v984
    %v1158 = vunpack.c.l.b16 %v985
    %v1159 = vunpack.c.h.b16 %v985
    %v1160 = vunpack.c.l.b16 %v986
    %v1161 = vunpack.c.l.b16 %v987
    %v1162 = vunpack.c.h.b16 %v987
    %v1163 = vunpack.c.l.b16 %v988
    %v1164 = vunpack.c.h.b16 %v988
    %v1165 = vunpack.c.l.b16 %v989
    %v1166 = vunpack.c.h.b16 %v989
    %v1167 = vunpack.c.l.b16 %v990
    %v1168 = vunpack.c.l.b16 %v991
    %v1169 = vunpack.c.h.b16 %v991
    %v1170 = vunpack.c.l.b16 %v992
    %v1171 = vunpack.c.h.b16 %v992
    %v1172 = vunpack.c.l.b16 %v993
    %v1173 = vunpack.c.h.b16 %v993
    %v1174 = vunpack.c.l.b16 %v994
    %v1175 = vunpack.c.l.b16 %v995
    %v1176 = vunpack.c.h.b16 %v995
    %v1177 = vunpack.c.l.b16 %v996
    %v1178 = vunpack.c.h.b16 %v996
    %v1179 = vunpack.c.l.b16 %v997
    %v1180 = vunpack.c.h.b16 %v997
    %v1181 = vunpack.c.l.b16 %v998
    %v1182 = vunpack.c.l.b16 %v999
    %v1183 = vunpack.c.h.b16 %v999
    %v1184 = vunpack.c.l.b16 %v1000
    %v1185 = vunpack.c.h.b16 %v1000
    %v1186 = vunpack.c.l.b16 %v1001
    %v1187 = vunpack.c.h.b16 %v1001
    %v1188 = vunpack.c.l.b16 %v1002
    %v1189 = vunpack.c.l.b16 %v1003
    %v1190 = vunpack.c.h.b16 %v1003
    %v1191 = vunpack.c.l.b16 %v1004
    %v1192 = vunpack.c.h.b16 %v1004
    %v1193 = vunpack.c.l.b16 %v1005
    %v1194 = vunpack.c.h.b16 %v1005
    %v1195 = vunpack.c.l.b16 %v1006
    %v1196 = vunpack.c.l.b16 %v1007
    %v1197 = vunpack.c.h.b16 %v1007
    %v1198 = vunpack.c.l.b16 %v1008
    %v1199 = vunpack.c.h.b16 %v1008
    %v1200 = vunpack.c.l.b16 %v1009
    %v1201 = vunpack.c.h.b16 %v1009
    %v1202 = vunpack.c.l.b16 %v1010
    %v1203 = vunpack.c.l.b16 %v1011
    %v1204 = vunpack.c.h.b16 %v1011
    %v1205 = vunpack.c.l.b16 %v1012
    %v1206 = vunpack.c.h.b16 %v1012
    %v1207 = vunpack.c.l.b16 %v1013
    %v1208 = vunpack.c.h.b16 %v1013
    %v1209 = vunpack.c.l.b16 %v1014
    %v1210 = vunpack.c.l.b16 %v1015
    %v1211 = vunpack.c.h.b16 %v1015
    %v1212 = vunpack.c.l.b16 %v1016
    %v1213 = vunpack.c.h.b16 %v1016
    %v1214 = vunpack.c.l.b16 %v1017
    %v1215 = vunpack.c.h.b16 %v1017
    %v1216 = vunpack.c.l.b16 %v1018
    %v1217 = vunpack.c.l.b16 %v1019
    %v1218 = vunpack.c.h.b16 %v1019
    %v1219 = vunpack.c.l.b16 %v1020
    %v1220 = vunpack.c.h.b16 %v1020
    %v1221 = vunpack.c.l.b16 %v1021
    %v1222 = vunpack.c.h.b16 %v1021
    %v1223 = vunpack.c.l.b16 %v1022
    %v1224 = vunpack.c.l.b16 %v1023
    %v1225 = vunpack.c.h.b16 %v1023
    %v1226 = vunpack.c.l.b16 %v1024
    %v1227 = vunpack.c.h.b16 %v1024
    %v1228 = vunpack.c.l.b16 %v1025
    %v1229 = vunpack.c.h.b16 %v1025
    %v1230 = vunpack.c.l.b16 %v1026
    %v1231 = vunpack.c.l.b16 %v1027
    %v1232 = vunpack.c.h.b16 %v1027
    %v1233 = vunpack.c.l.b16 %v1028
    %v1234 = vunpack.c.h.b16 %v1028
    %v1235 = vunpack.c.l.b16 %v1029
    %v1236 = vunpack.c.h.b16 %v1029
    %v1237 = vunpack.c.l.b16 %v1030
    %v1238 = vunpack.c.l.b16 %v1031
    %v1239 = vunpack.c.h.b16 %v1031
    %v1240 = vunpack.c.l.b16 %v1032
    %v1241 = vunpack.c.h.b16 %v1032
    %v1242 = vunpack.c.l.b16 %v1033
    %v1243 = vunpack.c.h.b16 %v1033
    %v1244 = vunpack.c.l.b16 %v1034
    %v1245 = vunpack.c.l.b16 %v1035
    %v1246 = vunpack.c.h.b16 %v1035
    %v1247 = vunpack.c.l.b16 %v1036
    %v1248 = vunpack.c.h.b16 %v1036
    %v1249 = vunpack.c.l.b16 %v1037
    %v1250 = vunpack.c.h.b16 %v1037
    %v1251 = vunpack.c.l.b16 %v1038
    %v1252 = vpack.c.b16 %v1147, %v1140
    %v1253 = vpack.c.b16 %v1148, %v1141
    %v1254 = vpack.c.b16 %v1149, %v1142
    %v1255 = vpack.c.b16 %v1150, %v1143
    %v1256 = vpack.c.b16 %v1151, %v1144
    %v1257 = vpack.c.b16 %v1152, %v1145
    %v1258 = vpack.c.b16 %v1153, %v1146
    %v1259 = vpack.c.b16 %v1161, %v1154
    %v1260 = vpack.c.b16 %v1162, %v1155
    %v1261 = vpack.c.b16 %v1163, %v1156
    %v1262 = vpack.c.b16 %v1164, %v1157
    %v1263 = vpack.c.b16 %v1165, %v1158
    %v1264 = vpack.c.b16 %v1166, %v1159
    %v1265 = vpack.c.b16 %v1167, %v1160
    %v1266 = vpack.c.b16 %v1175, %v1168
    %v1267 = vpack.c.b16 %v1176, %v1169
    %v1268 = vpack.c.b16 %v1177, %v1170
    %v1269 = vpack.c.b16 %v1178, %v1171
    %v1270 = vpack.c.b16 %v1179, %v1172
    %v1271 = vpack.c.b16 %v1180, %v1173
    %v1272 = vpack.c.b16 %v1181, %v1174
    %v1273 = vpack.c.b16 %v1189, %v1182
    %v1274 = vpack.c.b16 %v1190, %v1183
    %v1275 = vpack.c.b16 %v1191, %v1184
    %v1276 = vpack.c.b16 %v1192, %v1185
    %v1277 = vpack.c.b16 %v1193, %v1186
    %v1278 = vpack.c.b16 %v1194, %v1187
    %v1279 = vpack.c.b16 %v1195, %v1188
    %v1280 = vpack.c.b16 %v1203, %v1196
    %v1281 = vpack.c.b16 %v1204, %v1197
    %v1282 = vpack.c.b16 %v1205, %v1198
    %v1283 = vpack.c.b16 %v1206, %v1199
    %v1284 = vpack.c.b16 %v1207, %v1200
    %v1285 = vpack.c.b16 %v1208, %v1201
    %v1286 = vpack.c.b16 %v1209, %v1202
    %v1287 = vpack.c.b16 %v1217, %v1210
    %v1288 = vpack.c.b16 %v1218, %v1211
    %v1289 = vpack.c.b16 %v1219, %v1212
    %v1290 = vpack.c.b16 %v1220, %v1213
    %v1291 = vpack.c.b16 %v1221, %v1214
    %v1292 = vpack.c.b16 %v1222, %v1215
    %v1293 = vpack.c.b16 %v1223, %v1216
    %v1294 = vpack.c.b16 %v1231, %v1224
    %v1295 = vpack.c.b16 %v1232, %v1225
    %v1296 = vpack.c.b16 %v1233, %v1226
    %v1297 = vpack.c.b16 %v1234, %v1227
    %v1298 = vpack.c.b16 %v1235, %v1228
    %v1299 = vpack.c.b16 %v1236, %v1229
    %v1300 = vpack.c.b16 %v1237, %v1230
    %v1301 = vpack.c.b16 %v1245, %v1238
    %v1302 = vpack.c.b16 %v1246, %v1239
    %v1303 = vpack.c.b16 %v1247, %v1240
    %v1304 = vpack.c.b16 %v1248, %v1241
    %v1305 = vpack.c.b16 %v1249, %v1242
    %v1306 = vpack.c.b16 %v1250, %v1243
    %v1307 = vpack.c.b16 %v1251, %v1244
    %1364 = vmatprep.subr.bf16.mxu0 %v1302
    %1365 = vmatpush1.bf16.msra.mxu0 %v1301
    %1366 = vmatprep.subr.bf16.mxu0 %v1295
    %1367 = vmatpush1.bf16.msra.mxu0 %v1294
    %1368 = vmatprep.subr.bf16.mxu0 %v1288
    %1369 = vmatpush1.bf16.msra.mxu0 %v1287
    %1370 = vmatprep.subr.bf16.mxu0 %v1281
    %1371 = vmatpush1.bf16.msra.mxu0 %v1280
    %1372 = vmatprep.subr.bf16.mxu0 %v1274
    %1373 = vmatpush1.bf16.msra.mxu0 %v1273
    %1374 = vmatprep.subr.bf16.mxu0 %v1267
    %1375 = vmatpush1.bf16.msra.mxu0 %v1266
    %1376 = vmatprep.subr.bf16.mxu0 %v1260
    %1377 = vmatpush1.bf16.msra.mxu0 %v1259
    %1378 = vmatprep.subr.bf16.mxu0 %v1253
    %1379 = vmatpush1.bf16.msra.mxu0 %v1252
    %1380 = vmatprep.subr.bf16.mxu0 0
    %1381 = vmatpush2.bf16.msra.mxu0 0
    %1382 = vmatprep.subr.bf16.mxu0 0
    %1383 = vmatpush2.bf16.msra.mxu0 0
    %1384 = vmatprep.subr.bf16.mxu0 0
    %1385 = vmatpush2.bf16.msra.mxu0 0
    %1386 = vmatprep.subr.bf16.mxu0 0
    %1387 = vmatpush2.bf16.msra.mxu0 0
    %1388 = vmatprep.subr.bf16.mxu0 0
    %1389 = vmatpush2.bf16.msra.mxu0 0
    %1390 = vmatprep.subr.bf16.mxu0 0
    %1391 = vmatpush2.bf16.msra.mxu0 0
    %1392 = vmatprep.subr.bf16.mxu0 0
    %1393 = vmatpush2.bf16.msra.mxu0 0
    %1394 = vmatprep.subr.bf16.mxu0 0
    %1395 = vmatpush2.bf16.msra.mxu0 0
    %1396 = vmatprep.mubr.bf16.mxu0 0
    %1397 = vmatmul.mubr.bf16.gmra.mxu0 %v974
    %v1398 = vpop.f32.mrf.mxu0
    %v1399 = vadd.f32 %v1044, %v1398
    %v1400 = vpop.f32.mrf.mxu0
    %v1401 = vadd.f32 %v1048, %v1400
    %v1402 = vpop.f32.mrf.mxu0
    %v1403 = vpop.f32.mrf.mxu0
    %1404 = vdwg.mxu0
    %1405 = vmatprep.subr.bf16.mxu0 %v1304
    %1406 = vmatpush1.bf16.msra.mxu0 %v1303
    %1407 = vmatprep.subr.bf16.mxu0 %v1297
    %1408 = vmatpush1.bf16.msra.mxu0 %v1296
    %1409 = vmatprep.subr.bf16.mxu0 %v1290
    %1410 = vmatpush1.bf16.msra.mxu0 %v1289
    %1411 = vmatprep.subr.bf16.mxu0 %v1283
    %1412 = vmatpush1.bf16.msra.mxu0 %v1282
    %1413 = vmatprep.subr.bf16.mxu0 %v1276
    %1414 = vmatpush1.bf16.msra.mxu0 %v1275
    %1415 = vmatprep.subr.bf16.mxu0 %v1269
    %1416 = vmatpush1.bf16.msra.mxu0 %v1268
    %1417 = vmatprep.subr.bf16.mxu0 %v1262
    %1418 = vmatpush1.bf16.msra.mxu0 %v1261
    %1419 = vmatprep.subr.bf16.mxu0 %v1255
    %1420 = vmatpush1.bf16.msra.mxu0 %v1254
    %1421 = vmatprep.subr.bf16.mxu0 0
    %1422 = vmatpush2.bf16.msra.mxu0 0
    %1423 = vmatprep.subr.bf16.mxu0 0
    %1424 = vmatpush2.bf16.msra.mxu0 0
    %1425 = vmatprep.subr.bf16.mxu0 0
    %1426 = vmatpush2.bf16.msra.mxu0 0
    %1427 = vmatprep.subr.bf16.mxu0 0
    %1428 = vmatpush2.bf16.msra.mxu0 0
    %1429 = vmatprep.subr.bf16.mxu0 0
    %1430 = vmatpush2.bf16.msra.mxu0 0
    %1431 = vmatprep.subr.bf16.mxu0 0
    %1432 = vmatpush2.bf16.msra.mxu0 0
    %1433 = vmatprep.subr.bf16.mxu0 0
    %1434 = vmatpush2.bf16.msra.mxu0 0
    %1435 = vmatprep.subr.bf16.mxu0 0
    %1436 = vmatpush2.bf16.msra.mxu0 0
    %1437 = vmatprep.mubr.bf16.mxu0 0
    %1438 = vmatmul.mubr.bf16.gmra.mxu0 %v974
    %v1439 = vpop.f32.mrf.mxu0
    %v1440 = vadd.f32 %v1052, %v1439
    %v1441 = vpop.f32.mrf.mxu0
    %v1442 = vadd.f32 %v1056, %v1441
    %v1443 = vpop.f32.mrf.mxu0
    %v1444 = vpop.f32.mrf.mxu0
    %1445 = vdwg.mxu0
    %1446 = vmatprep.subr.bf16.mxu0 %v1306
    %1447 = vmatpush1.bf16.msra.mxu0 %v1305
    %1448 = vmatprep.subr.bf16.mxu0 %v1299
    %1449 = vmatpush1.bf16.msra.mxu0 %v1298
    %1450 = vmatprep.subr.bf16.mxu0 %v1292
    %1451 = vmatpush1.bf16.msra.mxu0 %v1291
    %1452 = vmatprep.subr.bf16.mxu0 %v1285
    %1453 = vmatpush1.bf16.msra.mxu0 %v1284
    %1454 = vmatprep.subr.bf16.mxu0 %v1278
    %1455 = vmatpush1.bf16.msra.mxu0 %v1277
    %1456 = vmatprep.subr.bf16.mxu0 %v1271
    %1457 = vmatpush1.bf16.msra.mxu0 %v1270
    %1458 = vmatprep.subr.bf16.mxu0 %v1264
    %1459 = vmatpush1.bf16.msra.mxu0 %v1263
    %1460 = vmatprep.subr.bf16.mxu0 %v1257
    %1461 = vmatpush1.bf16.msra.mxu0 %v1256
    %1462 = vmatprep.subr.bf16.mxu0 0
    %1463 = vmatpush2.bf16.msra.mxu0 0
    %1464 = vmatprep.subr.bf16.mxu0 0
    %1465 = vmatpush2.bf16.msra.mxu0 0
    %1466 = vmatprep.subr.bf16.mxu0 0
    %1467 = vmatpush2.bf16.msra.mxu0 0
    %1468 = vmatprep.subr.bf16.mxu0 0
    %1469 = vmatpush2.bf16.msra.mxu0 0
    %1470 = vmatprep.subr.bf16.mxu0 0
    %1471 = vmatpush2.bf16.msra.mxu0 0
    %1472 = vmatprep.subr.bf16.mxu0 0
    %1473 = vmatpush2.bf16.msra.mxu0 0
    %1474 = vmatprep.subr.bf16.mxu0 0
    %1475 = vmatpush2.bf16.msra.mxu0 0
    %1476 = vmatprep.subr.bf16.mxu0 0
    %1477 = vmatpush2.bf16.msra.mxu0 0
    %1478 = vmatprep.mubr.bf16.mxu0 0
    %1479 = vmatmul.mubr.bf16.gmra.mxu0 %v974
    %v1480 = vpop.f32.mrf.mxu0
    %v1481 = vadd.f32 %v1060, %v1480
    %v1482 = vpop.f32.mrf.mxu0
    %v1483 = vadd.f32 %v1064, %v1482
    %v1484 = vpop.f32.mrf.mxu0
    %v1485 = vpop.f32.mrf.mxu0
    %1486 = vdwg.mxu0
    %1487 = vmatprep.subr.bf16.mxu0 0
    %1488 = vmatpush1.bf16.msra.mxu0 %v1307
    %1489 = vmatprep.subr.bf16.mxu0 0
    %1490 = vmatpush1.bf16.msra.mxu0 %v1300
    %1491 = vmatprep.subr.bf16.mxu0 0
    %1492 = vmatpush1.bf16.msra.mxu0 %v1293
    %1493 = vmatprep.subr.bf16.mxu0 0
    %1494 = vmatpush1.bf16.msra.mxu0 %v1286
    %1495 = vmatprep.subr.bf16.mxu0 0
    %1496 = vmatpush1.bf16.msra.mxu0 %v1279
    %1497 = vmatprep.subr.bf16.mxu0 0
    %1498 = vmatpush1.bf16.msra.mxu0 %v1272
    %1499 = vmatprep.subr.bf16.mxu0 0
    %1500 = vmatpush1.bf16.msra.mxu0 %v1265
    %1501 = vmatprep.subr.bf16.mxu0 0
    %1502 = vmatpush1.bf16.msra.mxu0 %v1258
    %1503 = vmatprep.subr.bf16.mxu0 0
    %1504 = vmatpush2.bf16.msra.mxu0 0
    %1505 = vmatprep.subr.bf16.mxu0 0
    %1506 = vmatpush2.bf16.msra.mxu0 0
    %1507 = vmatprep.subr.bf16.mxu0 0
    %1508 = vmatpush2.bf16.msra.mxu0 0
    %1509 = vmatprep.subr.bf16.mxu0 0
    %1510 = vmatpush2.bf16.msra.mxu0 0
    %1511 = vmatprep.subr.bf16.mxu0 0
    %1512 = vmatpush2.bf16.msra.mxu0 0
    %1513 = vmatprep.subr.bf16.mxu0 0
    %1514 = vmatpush2.bf16.msra.mxu0 0
    %1515 = vmatprep.subr.bf16.mxu0 0
    %1516 = vmatpush2.bf16.msra.mxu0 0
    %1517 = vmatprep.subr.bf16.mxu0 0
    %1518 = vmatpush2.bf16.msra.mxu0 0
    %1519 = vmatprep.mubr.bf16.mxu0 0
    %1520 = vmatmul.mubr.bf16.gmra.mxu0 %v974
    %v1521 = vpop.f32.mrf.mxu0
    %v1522 = vadd.f32 %v1068, %v1521
    %v1523 = vpop.f32.mrf.mxu0
    %v1524 = vpop.f32.mrf.mxu0
    %v1525 = vpop.f32.mrf.mxu0
    %1526 = vdwg.mxu0
    %v1527 = vmul.f32 %v1399, 0.5
    %v1528 = vmul.f32 %v1401, 0.5
    %v1529 = vmul.f32 %v1440, 0.5
    %v1530 = vmul.f32 %v1442, 0.5
    %v1531 = vmul.f32 %v1481, 0.5
    %v1532 = vmul.f32 %v1483, 0.5
    %v1533 = vmul.f32 %v1522, 0.5
    %v1534 = vtanh.pop %v1527
    %v1535 = vtanh.pop %v1528
    %v1536 = vtanh.pop %v1529
    %v1537 = vtanh.pop %v1530
    %v1538 = vtanh.pop %v1531
    %v1539 = vtanh.pop %v1532
    %v1540 = vtanh.pop %v1533
    %v1541 = vadd.f32 %v1534, 1.0
    %v1542 = vadd.f32 %v1535, 1.0
    %v1543 = vadd.f32 %v1536, 1.0
    %v1544 = vadd.f32 %v1537, 1.0
    %v1545 = vadd.f32 %v1538, 1.0
    %v1546 = vadd.f32 %v1539, 1.0
    %v1547 = vadd.f32 %v1540, 1.0
    %v1548 = vmul.f32 %v1541, 0.5
    %v1549 = vmul.f32 %v1542, 0.5
    %v1550 = vmul.f32 %v1543, 0.5
    %v1551 = vmul.f32 %v1544, 0.5
    %v1552 = vmul.f32 %v1545, 0.5
    %v1553 = vmul.f32 %v1546, 0.5
    %v1554 = vmul.f32 %v1547, 0.5
    %1555 = vst [vmem:[#allocation2] sm:$0xff] %v1548
    %1556 = vst [vmem:[#allocation2 + $0x8] sm:$0xff] %v1549
    %1557 = vst [vmem:[#allocation2 + $0x10] sm:$0xff] %v1550
    %1558 = vst [vmem:[#allocation2 + $0x18] sm:$0xff] %v1551
    %1559 = vst [vmem:[#allocation2 + $0x20] sm:$0xff] %v1552
    %1560 = vst [vmem:[#allocation2 + $0x28] sm:$0xff] %v1553
    %1561 = vst.msk [vmem:[#allocation2 + $0x30] sm:$0xff] %vm459, %v1554
    // Predicated region
    $region54: #{tpu_custom_call.1} parent=1 // pred_check
      _
    $region55: #{tpu_custom_call.1} parent=1 // pred_check_branch
      %1563 = sbr.rel (0) target = $region57
    $region56: #{tpu_custom_call.1} parent=1 // pred_region
      %s1565 = ssub.s32 896, 896
      %1566 = vsyncadd [#allocation3], %s1565
      %s1568 = sshll.u32 [#allocation2], 4
      %s1569 = int_to_ptr.vmem [resolvable:$true] %s1568
      %1571 = dma.vmem_to_hbm [thread:$0]  %s1569, 896, %s13, [#allocation3]
    $region57: #{tpu_custom_call.1} parent=1 // pred_fallthru
      _
    // Predicated region
    $region58: #{tpu_custom_call.1} parent=1 // pred_check
      _
    $region59: #{tpu_custom_call.1} parent=1 // pred_check_branch
      %1573 = sbr.rel (0) target = $region61
    $region60: #{tpu_custom_call.1} parent=1 // pred_region
      %1574 = dma.done [#allocation3], 896
    $region61: #{tpu_custom_call.1} parent=1 // pred_fallthru
      _
    %1575 = vsyncpa [#allocation3], 1

</llo_original>
